<compile_context>
chip_gen: v6e
topology: v6e:2x2x1
jax: 0.10.0
libtpu: 0.0.40
codegen_flags: <defaults>
</compile_context>

<pallas_src>
import functools

import jax
import jax.numpy as jnp
from jax.experimental import pallas as pl
from jax.experimental.pallas import tpu as pltpu


def _round_up(x, m):
    return ((x + m - 1) // m) * m


# ----------------------------- fused forward kernel --------------------------
def _fused_kernel(*refs, cfg):
    """(word+pos) -> LayerNorm -> [tap-decomposed conv1d 'same']*n -> (v+conved)*0.5."""
    L, D, F, eps, layers = cfg
    n_layers = len(layers)
    x_ref, gamma_ref, beta_ref = refs[0], refs[1], refs[2]
    wb_refs = refs[3:3 + 2 * n_layers]
    out_ref = refs[3 + 2 * n_layers]
    pad_ref = refs[4 + 2 * n_layers]          # (Rpad, Cmax) bf16 scratch
    Rpad, Cmax = pad_ref.shape

    # ---- Embeddings LayerNorm (stats in f32) --------------------------------
    x = x_ref[...][0].astype(jnp.float32)                       # (L, D)
    mu = jnp.mean(x, axis=-1, keepdims=True)
    var = jnp.mean(jnp.square(x - mu), axis=-1, keepdims=True)
    v = (x - mu) * jax.lax.rsqrt(var + eps)
    v = v * gamma_ref[...] + beta_ref[...]                       # (L, D) f32

    # ---- zero ONLY the halo rows (valid rows are overwritten every layer) ----
    # Halo rows are never written by any layer, so zeroing once per block gives
    # the 'same' zero padding for all layers.
    if F > 0:
        pad_ref[pl.ds(0, F), :] = jnp.zeros((F, Cmax), pad_ref.dtype)
    tail = Rpad - (F + L)
    if tail > 0:
        pad_ref[pl.ds(F + L, tail), :] = jnp.zeros((tail, Cmax), pad_ref.dtype)

    # ---- tap-decomposed 'same' convolutions (all static row shifts) ----------
    cur = v
    for li, (K, Cin, Cout) in enumerate(layers):
        p = (K - 1) // 2
        w_ref = wb_refs[2 * li]                                  # (K, Cin, Cout) bf16
        b_ref = wb_refs[2 * li + 1]                              # (1, Cout) f32

        # Write this layer's input into the valid (sublane-aligned) rows.
        pad_ref[pl.ds(F, L), pl.ds(0, Cin)] = cur.astype(pad_ref.dtype)

        acc = jnp.zeros((L, Cout), jnp.float32)
        for j in range(K):
            # output row l consumes input row (l + j - p): a static row slice.
            xs = pad_ref[pl.ds(F + j - p, L), pl.ds(0, Cin)]      # (L, Cin) bf16
            acc = acc + jnp.dot(xs, w_ref[j],
                                preferred_element_type=jnp.float32)
        cur = acc + b_ref[...]                                    # (L, Cout) f32
        # TODO(synk): dropout after each conv is identity (eval mode).

    # ---- residual + scale -----------------------------------------------------
    out_ref[...] = ((v + cur) * 0.5)[None, :, :].astype(out_ref.dtype)


def fused_forward_pallas(x, gamma, beta, conv_params, *, eps=1e-5):
    """x: (B, L, D) = word_emb[ids] + pos_emb[:L]; conv_params: [(w(K,Cin,Cout), b(Cout,))]."""
    B, L, D = x.shape
    layers = []
    flat_args = [x,
                 gamma.reshape(1, D).astype(jnp.float32),
                 beta.reshape(1, D).astype(jnp.float32)]
    prev_c = D
    for (w, bvec) in conv_params:
        K, Cin, Cout = w.shape
        assert K % 2 == 1, "ProteinCNN residual requires odd ('same') kernel sizes"
        assert Cin == prev_c, "conv channel chain mismatch"
        layers.append((K, Cin, Cout))
        flat_args.append(w.astype(jnp.bfloat16))                  # bf16 MXU operand
        flat_args.append(bvec.reshape(1, Cout).astype(jnp.float32))
        prev_c = Cout
    assert prev_c == D, "num_filters[-1] must equal embedding_dim for the residual"

    Pmax = max(((k - 1) // 2 for (k, _, _) in layers), default=0)
    F = _round_up(Pmax, 8)                       # sublane-aligned front halo
    Rpad = _round_up(F + L + Pmax, 8)
    Cmax = max((cin for (_, cin, _) in layers), default=D)
    cfg = (L, D, F, float(eps), tuple(layers))

    conv_flops = 2 * B * L * sum(k * cin * cout for (k, cin, cout) in layers)
    bytes_accessed = sum(int(a.size) * a.dtype.itemsize for a in flat_args)
    bytes_accessed += B * L * D * 4
    cost = pl.CostEstimate(flops=conv_flops + 10 * B * L * D,
                           transcendentals=B * L,
                           bytes_accessed=bytes_accessed)

    def _const_spec(a):
        return pl.BlockSpec(a.shape, lambda b, _nd=a.ndim: (0,) * _nd)

    in_specs = [pl.BlockSpec((1, L, D), lambda b: (b, 0, 0))]
    in_specs += [_const_spec(a) for a in flat_args[1:]]

    out = pl.pallas_call(
        functools.partial(_fused_kernel, cfg=cfg),
        out_shape=jax.ShapeDtypeStruct((B, L, D), x.dtype),
        grid=(B,),                               # one sequence per grid step
        in_specs=in_specs,
        out_specs=pl.BlockSpec((1, L, D), lambda b: (b, 0, 0)),
        scratch_shapes=[pltpu.VMEM((Rpad, Cmax), jnp.bfloat16)],
        compiler_params=pltpu.CompilerParams(dimension_semantics=("parallel",)),
        cost_estimate=cost,
    )(*flat_args)
    return out


# --------------------------------- ProteinCNN --------------------------------
def init_params(key, embedding_dim, num_filters, kernel_size,
                vocab_size=16693, max_pos=545):
    D = embedding_dim
    keys = jax.random.split(key, 2 + 2 * len(kernel_size))
    word_emb = jax.random.normal(keys[0], (vocab_size, D), jnp.float32) * 0.02
    word_emb = word_emb.at[0].set(0.0)  # padding_idx=0
    pos_emb = jax.random.normal(keys[1], (max_pos, D), jnp.float32) * 0.02
    ln_gamma = jnp.ones((D,), jnp.float32)
    ln_beta = jnp.zeros((D,), jnp.float32)
    in_ch = [D] + list(num_filters)
    convs = []
    for i, k in enumerate(kernel_size):
        cin, cout = in_ch[i], in_ch[i + 1]
        w = jax.random.normal(keys[2 + 2 * i], (k, cin, cout), jnp.float32)
        w = w / jnp.sqrt(float(cin * k))
        b = jax.random.normal(keys[3 + 2 * i], (cout,), jnp.float32) * 0.01
        convs.append((w, b))
    return dict(word_emb=word_emb, pos_emb=pos_emb,
                ln_gamma=ln_gamma, ln_beta=ln_beta, convs=convs)


def protein_cnn_forward(params, token_ids):
    """token_ids: (B, L) int32.  Returns (B, L, D) float32."""
    B, L = token_ids.shape
    D = params["word_emb"].shape[1]
    assert L <= params["pos_emb"].shape[0], "sequence longer than position table"
    # Embedding gather + position add stay in XLA (one small fused gather);
    # everything downstream runs inside the fused Pallas kernel.
    word = jnp.take(params["word_emb"], token_ids, axis=0)        # (B, L, D)
    pos = params["pos_emb"][:L][None, :, :]                       # (1, L, D)
    x = word + pos
    return fused_forward_pallas(x, params["ln_gamma"], params["ln_beta"],
                                params["convs"])


# ------------------------------ pure-JAX references --------------------------
def reference_forward(params, token_ids, *, conv_dtype=jnp.float32):
    L = token_ids.shape[1]
    word = jnp.take(params["word_emb"], token_ids, axis=0)
    v = word + params["pos_emb"][:L][None]
    mu = jnp.mean(v, -1, keepdims=True)
    var = jnp.mean((v - mu) ** 2, -1, keepdims=True)
    v = (v - mu) / jnp.sqrt(var + 1e-5) * params["ln_gamma"] + params["ln_beta"]
    conved = v
    for (w, b) in params["convs"]:
        k = w.shape[0]
        p = (k - 1) // 2
        conved = jax.lax.conv_general_dilated(
            conved.astype(conv_dtype), w.astype(conv_dtype),
            window_strides=(1,), padding=[(p, p)],
            dimension_numbers=("NWC", "WIO", "NWC"),
            preferred_element_type=jnp.float32) + b
    return (v + conved) * 0.5


if __name__ == "__main__":
    key = jax.random.PRNGKey(0)
    embedding_dim = 32
    num_filters = [32, 32, 32]     # last must equal embedding_dim for the residual
    kernel_size = [3, 5, 7]        # odd kernels -> 'same' length, as the module requires
    B, L = 2, 16

    pkey, dkey = jax.random.split(key)
    params = init_params(pkey, embedding_dim, num_filters, kernel_size)
    token_ids = jax.random.randint(dkey, (B, L), 0, 16693, dtype=jnp.int32)

    fwd = jax.jit(protein_cnn_forward)
    out = jax.block_until_ready(fwd(params, token_ids))
    assert out.shape == (B, L, embedding_dim)

    # Precision-matched reference (bf16 conv operands, f32 accumulation): tight check.
    ref_bf16 = reference_forward(params, token_ids, conv_dtype=jnp.bfloat16)
    if not jnp.allclose(out, ref_bf16, rtol=2e-3, atol=2e-3):
        raise AssertionError("Pallas output mismatch vs bf16-matched JAX reference")

    # Full-f32 reference: loose sanity check of the overall scheme.
    ref_f32 = reference_forward(params, token_ids, conv_dtype=jnp.float32)
    if not jnp.allclose(out, ref_f32, rtol=5e-2, atol=5e-2):
        raise AssertionError("Pallas output mismatch vs f32 JAX reference")

    print("KERNEL_OK")
</pallas_src>

<mosaic_0001>
module attributes {stable_mosaic.version = 11 : i64} {
  func.func @_fused_kernel(%arg0: i32, %arg1: memref<1x16x32xf32, #tpu.memory_space<vmem>>, %arg2: memref<1x32xf32, #tpu.memory_space<vmem>>, %arg3: memref<1x32xf32, #tpu.memory_space<vmem>>, %arg4: memref<3x32x32xbf16, #tpu.memory_space<vmem>>, %arg5: memref<1x32xf32, #tpu.memory_space<vmem>>, %arg6: memref<5x32x32xbf16, #tpu.memory_space<vmem>>, %arg7: memref<1x32xf32, #tpu.memory_space<vmem>>, %arg8: memref<7x32x32xbf16, #tpu.memory_space<vmem>>, %arg9: memref<1x32xf32, #tpu.memory_space<vmem>>, %arg10: memref<1x16x32xf32, #tpu.memory_space<vmem>>, %arg11: memref<32x32xbf16, #tpu.memory_space<vmem>>) attributes {dimension_semantics = [#tpu.dimension_semantics<parallel>], iteration_bounds = array<i64: 2>, scalar_prefetch = 0 : i64, scratch_operands = 1 : i64, tpu.core_type = #tpu.core_type<tc>, window_params = [{transform_indices = @transform_0, window_bounds = array<i64: 1, 16, 32>}, {pipeline_mode = #tpu.pipeline_mode<synchronous>, transform_indices = @transform_1, window_bounds = array<i64: 1, 32>}, {pipeline_mode = #tpu.pipeline_mode<synchronous>, transform_indices = @transform_2, window_bounds = array<i64: 1, 32>}, {pipeline_mode = #tpu.pipeline_mode<synchronous>, transform_indices = @transform_3, window_bounds = array<i64: 3, 32, 32>}, {pipeline_mode = #tpu.pipeline_mode<synchronous>, transform_indices = @transform_4, window_bounds = array<i64: 1, 32>}, {pipeline_mode = #tpu.pipeline_mode<synchronous>, transform_indices = @transform_5, window_bounds = array<i64: 5, 32, 32>}, {pipeline_mode = #tpu.pipeline_mode<synchronous>, transform_indices = @transform_6, window_bounds = array<i64: 1, 32>}, {pipeline_mode = #tpu.pipeline_mode<synchronous>, transform_indices = @transform_7, window_bounds = array<i64: 7, 32, 32>}, {pipeline_mode = #tpu.pipeline_mode<synchronous>, transform_indices = @transform_8, window_bounds = array<i64: 1, 32>}, {transform_indices = @transform_9, window_bounds = array<i64: 1, 16, 32>}]} {
    %c0 = arith.constant 0 : index
    %c0_0 = arith.constant 0 : index
    %c0_1 = arith.constant 0 : index
    %0 = vector.load %arg1[%c0, %c0_0, %c0_1] : memref<1x16x32xf32, #tpu.memory_space<vmem>>, vector<1x16x32xf32>
    %1 = vector.shape_cast %0 : vector<1x16x32xf32> to vector<16x32xf32>
    %cst = arith.constant dense<0.000000e+00> : vector<16xf32>
    %2 = vector.multi_reduction <add>, %1, %cst [1] : vector<16x32xf32> to vector<16xf32>
    %3 = vector.shape_cast %2 : vector<16xf32> to vector<16x1xf32>
    %cst_2 = arith.constant 3.200000e+01 : f32
    %4 = vector.broadcast %cst_2 : f32 to vector<16x1xf32>
    %5 = arith.divf %3, %4 : vector<16x1xf32>
    %6 = vector.broadcast %5 : vector<16x1xf32> to vector<16x32xf32>
    %7 = arith.subf %1, %6 : vector<16x32xf32>
    %8 = arith.mulf %7, %7 : vector<16x32xf32>
    %cst_3 = arith.constant dense<0.000000e+00> : vector<16xf32>
    %9 = vector.multi_reduction <add>, %8, %cst_3 [1] : vector<16x32xf32> to vector<16xf32>
    %10 = vector.shape_cast %9 : vector<16xf32> to vector<16x1xf32>
    %cst_4 = arith.constant 3.200000e+01 : f32
    %11 = vector.broadcast %cst_4 : f32 to vector<16x1xf32>
    %12 = arith.divf %10, %11 : vector<16x1xf32>
    %13 = vector.broadcast %5 : vector<16x1xf32> to vector<16x32xf32>
    %14 = arith.subf %1, %13 : vector<16x32xf32>
    %cst_5 = arith.constant 9.99999974E-6 : f32
    %15 = vector.broadcast %cst_5 : f32 to vector<16x1xf32>
    %16 = arith.addf %12, %15 : vector<16x1xf32>
    %17 = math.rsqrt %16 : vector<16x1xf32>
    %18 = vector.broadcast %17 : vector<16x1xf32> to vector<16x32xf32>
    %19 = arith.mulf %14, %18 : vector<16x32xf32>
    %c0_6 = arith.constant 0 : index
    %c0_7 = arith.constant 0 : index
    %20 = vector.load %arg2[%c0_6, %c0_7] : memref<1x32xf32, #tpu.memory_space<vmem>>, vector<1x32xf32>
    %21 = vector.broadcast %20 : vector<1x32xf32> to vector<16x32xf32>
    %22 = arith.mulf %19, %21 : vector<16x32xf32>
    %c0_8 = arith.constant 0 : index
    %c0_9 = arith.constant 0 : index
    %23 = vector.load %arg3[%c0_8, %c0_9] : memref<1x32xf32, #tpu.memory_space<vmem>>, vector<1x32xf32>
    %24 = vector.broadcast %23 : vector<1x32xf32> to vector<16x32xf32>
    %25 = arith.addf %22, %24 : vector<16x32xf32>
    %cst_10 = arith.constant 0.000000e+00 : bf16
    %26 = vector.broadcast %cst_10 : bf16 to vector<8x32xbf16>
    %c0_11 = arith.constant 0 : index
    %c0_12 = arith.constant 0 : index
    %27 = vector.load %arg11[%c0_11, %c0_12] : memref<32x32xbf16, #tpu.memory_space<vmem>>, vector<8x32xbf16>
    tpu.vector_store %arg11[%c0_11, %c0_12], %26 {strides = array<i32>} : memref<32x32xbf16, #tpu.memory_space<vmem>>, vector<8x32xbf16>,
    %cst_13 = arith.constant 0.000000e+00 : bf16
    %28 = vector.broadcast %cst_13 : bf16 to vector<8x32xbf16>
    %c24 = arith.constant 24 : index
    %c0_14 = arith.constant 0 : index
    %29 = vector.load %arg11[%c24, %c0_14] : memref<32x32xbf16, #tpu.memory_space<vmem>>, vector<8x32xbf16>
    tpu.vector_store %arg11[%c24, %c0_14], %28 {strides = array<i32>} : memref<32x32xbf16, #tpu.memory_space<vmem>>, vector<8x32xbf16>,
    %30 = arith.truncf %25 : vector<16x32xf32> to vector<16x32xbf16>
    %c8 = arith.constant 8 : index
    %c0_15 = arith.constant 0 : index
    %31 = vector.load %arg11[%c8, %c0_15] : memref<32x32xbf16, #tpu.memory_space<vmem>>, vector<16x32xbf16>
    tpu.vector_store %arg11[%c8, %c0_15], %30 {strides = array<i32>} : memref<32x32xbf16, #tpu.memory_space<vmem>>, vector<16x32xbf16>,
    %cst_16 = arith.constant 0.000000e+00 : f32
    %32 = vector.broadcast %cst_16 : f32 to vector<16x32xf32>
    %c7 = arith.constant 7 : index
    %c0_17 = arith.constant 0 : index
    %33 = vector.load %arg11[%c7, %c0_17] : memref<32x32xbf16, #tpu.memory_space<vmem>>, vector<16x32xbf16>
    %c0_18 = arith.constant 0 : index
    %c0_19 = arith.constant 0 : index
    %c0_20 = arith.constant 0 : index
    %34 = vector.load %arg4[%c0_18, %c0_19, %c0_20] : memref<3x32x32xbf16, #tpu.memory_space<vmem>>, vector<1x32x32xbf16>
    %35 = vector.shape_cast %34 : vector<1x32x32xbf16> to vector<32x32xbf16>
    %cst_21 = arith.constant dense<0.000000e+00> : vector<16x32xf32>
    %36 = tpu.matmul %33, %35, %cst_21 {dimension_numbers = #tpu.dot_dimension_numbers<[1], [0], [0], [1], [0, 0, 1, 1], [], []>} : vector<16x32xbf16>, vector<32x32xbf16>, vector<16x32xf32> -> vector<16x32xf32>
    %37 = arith.addf %32, %36 : vector<16x32xf32>
    %c8_22 = arith.constant 8 : index
    %c0_23 = arith.constant 0 : index
    %38 = vector.load %arg11[%c8_22, %c0_23] : memref<32x32xbf16, #tpu.memory_space<vmem>>, vector<16x32xbf16>
    %c1 = arith.constant 1 : index
    %c0_24 = arith.constant 0 : index
    %c0_25 = arith.constant 0 : index
    %39 = vector.load %arg4[%c1, %c0_24, %c0_25] : memref<3x32x32xbf16, #tpu.memory_space<vmem>>, vector<1x32x32xbf16>
    %40 = vector.shape_cast %39 : vector<1x32x32xbf16> to vector<32x32xbf16>
    %cst_26 = arith.constant dense<0.000000e+00> : vector<16x32xf32>
    %41 = tpu.matmul %38, %40, %cst_26 {dimension_numbers = #tpu.dot_dimension_numbers<[1], [0], [0], [1], [0, 0, 1, 1], [], []>} : vector<16x32xbf16>, vector<32x32xbf16>, vector<16x32xf32> -> vector<16x32xf32>
    %42 = arith.addf %37, %41 : vector<16x32xf32>
    %c9 = arith.constant 9 : index
    %c0_27 = arith.constant 0 : index
    %43 = vector.load %arg11[%c9, %c0_27] : memref<32x32xbf16, #tpu.memory_space<vmem>>, vector<16x32xbf16>
    %c2 = arith.constant 2 : index
    %c0_28 = arith.constant 0 : index
    %c0_29 = arith.constant 0 : index
    %44 = vector.load %arg4[%c2, %c0_28, %c0_29] : memref<3x32x32xbf16, #tpu.memory_space<vmem>>, vector<1x32x32xbf16>
    %45 = vector.shape_cast %44 : vector<1x32x32xbf16> to vector<32x32xbf16>
    %cst_30 = arith.constant dense<0.000000e+00> : vector<16x32xf32>
    %46 = tpu.matmul %43, %45, %cst_30 {dimension_numbers = #tpu.dot_dimension_numbers<[1], [0], [0], [1], [0, 0, 1, 1], [], []>} : vector<16x32xbf16>, vector<32x32xbf16>, vector<16x32xf32> -> vector<16x32xf32>
    %47 = arith.addf %42, %46 : vector<16x32xf32>
    %c0_31 = arith.constant 0 : index
    %c0_32 = arith.constant 0 : index
    %48 = vector.load %arg5[%c0_31, %c0_32] : memref<1x32xf32, #tpu.memory_space<vmem>>, vector<1x32xf32>
    %49 = vector.broadcast %48 : vector<1x32xf32> to vector<16x32xf32>
    %50 = arith.addf %47, %49 : vector<16x32xf32>
    %51 = arith.truncf %50 : vector<16x32xf32> to vector<16x32xbf16>
    %c8_33 = arith.constant 8 : index
    %c0_34 = arith.constant 0 : index
    %52 = vector.load %arg11[%c8_33, %c0_34] : memref<32x32xbf16, #tpu.memory_space<vmem>>, vector<16x32xbf16>
    tpu.vector_store %arg11[%c8_33, %c0_34], %51 {strides = array<i32>} : memref<32x32xbf16, #tpu.memory_space<vmem>>, vector<16x32xbf16>,
    %cst_35 = arith.constant 0.000000e+00 : f32
    %53 = vector.broadcast %cst_35 : f32 to vector<16x32xf32>
    %c6 = arith.constant 6 : index
    %c0_36 = arith.constant 0 : index
    %54 = vector.load %arg11[%c6, %c0_36] : memref<32x32xbf16, #tpu.memory_space<vmem>>, vector<16x32xbf16>
    %c0_37 = arith.constant 0 : index
    %c0_38 = arith.constant 0 : index
    %c0_39 = arith.constant 0 : index
    %55 = vector.load %arg6[%c0_37, %c0_38, %c0_39] : memref<5x32x32xbf16, #tpu.memory_space<vmem>>, vector<1x32x32xbf16>
    %56 = vector.shape_cast %55 : vector<1x32x32xbf16> to vector<32x32xbf16>
    %cst_40 = arith.constant dense<0.000000e+00> : vector<16x32xf32>
    %57 = tpu.matmul %54, %56, %cst_40 {dimension_numbers = #tpu.dot_dimension_numbers<[1], [0], [0], [1], [0, 0, 1, 1], [], []>} : vector<16x32xbf16>, vector<32x32xbf16>, vector<16x32xf32> -> vector<16x32xf32>
    %58 = arith.addf %53, %57 : vector<16x32xf32>
    %c7_41 = arith.constant 7 : index
    %c0_42 = arith.constant 0 : index
    %59 = vector.load %arg11[%c7_41, %c0_42] : memref<32x32xbf16, #tpu.memory_space<vmem>>, vector<16x32xbf16>
    %c1_43 = arith.constant 1 : index
    %c0_44 = arith.constant 0 : index
    %c0_45 = arith.constant 0 : index
    %60 = vector.load %arg6[%c1_43, %c0_44, %c0_45] : memref<5x32x32xbf16, #tpu.memory_space<vmem>>, vector<1x32x32xbf16>
    %61 = vector.shape_cast %60 : vector<1x32x32xbf16> to vector<32x32xbf16>
    %cst_46 = arith.constant dense<0.000000e+00> : vector<16x32xf32>
    %62 = tpu.matmul %59, %61, %cst_46 {dimension_numbers = #tpu.dot_dimension_numbers<[1], [0], [0], [1], [0, 0, 1, 1], [], []>} : vector<16x32xbf16>, vector<32x32xbf16>, vector<16x32xf32> -> vector<16x32xf32>
    %63 = arith.addf %58, %62 : vector<16x32xf32>
    %c8_47 = arith.constant 8 : index
    %c0_48 = arith.constant 0 : index
    %64 = vector.load %arg11[%c8_47, %c0_48] : memref<32x32xbf16, #tpu.memory_space<vmem>>, vector<16x32xbf16>
    %c2_49 = arith.constant 2 : index
    %c0_50 = arith.constant 0 : index
    %c0_51 = arith.constant 0 : index
    %65 = vector.load %arg6[%c2_49, %c0_50, %c0_51] : memref<5x32x32xbf16, #tpu.memory_space<vmem>>, vector<1x32x32xbf16>
    %66 = vector.shape_cast %65 : vector<1x32x32xbf16> to vector<32x32xbf16>
    %cst_52 = arith.constant dense<0.000000e+00> : vector<16x32xf32>
    %67 = tpu.matmul %64, %66, %cst_52 {dimension_numbers = #tpu.dot_dimension_numbers<[1], [0], [0], [1], [0, 0, 1, 1], [], []>} : vector<16x32xbf16>, vector<32x32xbf16>, vector<16x32xf32> -> vector<16x32xf32>
    %68 = arith.addf %63, %67 : vector<16x32xf32>
    %c9_53 = arith.constant 9 : index
    %c0_54 = arith.constant 0 : index
    %69 = vector.load %arg11[%c9_53, %c0_54] : memref<32x32xbf16, #tpu.memory_space<vmem>>, vector<16x32xbf16>
    %c3 = arith.constant 3 : index
    %c0_55 = arith.constant 0 : index
    %c0_56 = arith.constant 0 : index
    %70 = vector.load %arg6[%c3, %c0_55, %c0_56] : memref<5x32x32xbf16, #tpu.memory_space<vmem>>, vector<1x32x32xbf16>
    %71 = vector.shape_cast %70 : vector<1x32x32xbf16> to vector<32x32xbf16>
    %cst_57 = arith.constant dense<0.000000e+00> : vector<16x32xf32>
    %72 = tpu.matmul %69, %71, %cst_57 {dimension_numbers = #tpu.dot_dimension_numbers<[1], [0], [0], [1], [0, 0, 1, 1], [], []>} : vector<16x32xbf16>, vector<32x32xbf16>, vector<16x32xf32> -> vector<16x32xf32>
    %73 = arith.addf %68, %72 : vector<16x32xf32>
    %c10 = arith.constant 10 : index
    %c0_58 = arith.constant 0 : index
    %74 = vector.load %arg11[%c10, %c0_58] : memref<32x32xbf16, #tpu.memory_space<vmem>>, vector<16x32xbf16>
    %c4 = arith.constant 4 : index
    %c0_59 = arith.constant 0 : index
    %c0_60 = arith.constant 0 : index
    %75 = vector.load %arg6[%c4, %c0_59, %c0_60] : memref<5x32x32xbf16, #tpu.memory_space<vmem>>, vector<1x32x32xbf16>
    %76 = vector.shape_cast %75 : vector<1x32x32xbf16> to vector<32x32xbf16>
    %cst_61 = arith.constant dense<0.000000e+00> : vector<16x32xf32>
    %77 = tpu.matmul %74, %76, %cst_61 {dimension_numbers = #tpu.dot_dimension_numbers<[1], [0], [0], [1], [0, 0, 1, 1], [], []>} : vector<16x32xbf16>, vector<32x32xbf16>, vector<16x32xf32> -> vector<16x32xf32>
    %78 = arith.addf %73, %77 : vector<16x32xf32>
    %c0_62 = arith.constant 0 : index
    %c0_63 = arith.constant 0 : index
    %79 = vector.load %arg7[%c0_62, %c0_63] : memref<1x32xf32, #tpu.memory_space<vmem>>, vector<1x32xf32>
    %80 = vector.broadcast %79 : vector<1x32xf32> to vector<16x32xf32>
    %81 = arith.addf %78, %80 : vector<16x32xf32>
    %82 = arith.truncf %81 : vector<16x32xf32> to vector<16x32xbf16>
    %c8_64 = arith.constant 8 : index
    %c0_65 = arith.constant 0 : index
    %83 = vector.load %arg11[%c8_64, %c0_65] : memref<32x32xbf16, #tpu.memory_space<vmem>>, vector<16x32xbf16>
    tpu.vector_store %arg11[%c8_64, %c0_65], %82 {strides = array<i32>} : memref<32x32xbf16, #tpu.memory_space<vmem>>, vector<16x32xbf16>,
    %cst_66 = arith.constant 0.000000e+00 : f32
    %84 = vector.broadcast %cst_66 : f32 to vector<16x32xf32>
    %c5 = arith.constant 5 : index
    %c0_67 = arith.constant 0 : index
    %85 = vector.load %arg11[%c5, %c0_67] : memref<32x32xbf16, #tpu.memory_space<vmem>>, vector<16x32xbf16>
    %c0_68 = arith.constant 0 : index
    %c0_69 = arith.constant 0 : index
    %c0_70 = arith.constant 0 : index
    %86 = vector.load %arg8[%c0_68, %c0_69, %c0_70] : memref<7x32x32xbf16, #tpu.memory_space<vmem>>, vector<1x32x32xbf16>
    %87 = vector.shape_cast %86 : vector<1x32x32xbf16> to vector<32x32xbf16>
    %cst_71 = arith.constant dense<0.000000e+00> : vector<16x32xf32>
    %88 = tpu.matmul %85, %87, %cst_71 {dimension_numbers = #tpu.dot_dimension_numbers<[1], [0], [0], [1], [0, 0, 1, 1], [], []>} : vector<16x32xbf16>, vector<32x32xbf16>, vector<16x32xf32> -> vector<16x32xf32>
    %89 = arith.addf %84, %88 : vector<16x32xf32>
    %c6_72 = arith.constant 6 : index
    %c0_73 = arith.constant 0 : index
    %90 = vector.load %arg11[%c6_72, %c0_73] : memref<32x32xbf16, #tpu.memory_space<vmem>>, vector<16x32xbf16>
    %c1_74 = arith.constant 1 : index
    %c0_75 = arith.constant 0 : index
    %c0_76 = arith.constant 0 : index
    %91 = vector.load %arg8[%c1_74, %c0_75, %c0_76] : memref<7x32x32xbf16, #tpu.memory_space<vmem>>, vector<1x32x32xbf16>
    %92 = vector.shape_cast %91 : vector<1x32x32xbf16> to vector<32x32xbf16>
    %cst_77 = arith.constant dense<0.000000e+00> : vector<16x32xf32>
    %93 = tpu.matmul %90, %92, %cst_77 {dimension_numbers = #tpu.dot_dimension_numbers<[1], [0], [0], [1], [0, 0, 1, 1], [], []>} : vector<16x32xbf16>, vector<32x32xbf16>, vector<16x32xf32> -> vector<16x32xf32>
    %94 = arith.addf %89, %93 : vector<16x32xf32>
    %c7_78 = arith.constant 7 : index
    %c0_79 = arith.constant 0 : index
    %95 = vector.load %arg11[%c7_78, %c0_79] : memref<32x32xbf16, #tpu.memory_space<vmem>>, vector<16x32xbf16>
    %c2_80 = arith.constant 2 : index
    %c0_81 = arith.constant 0 : index
    %c0_82 = arith.constant 0 : index
    %96 = vector.load %arg8[%c2_80, %c0_81, %c0_82] : memref<7x32x32xbf16, #tpu.memory_space<vmem>>, vector<1x32x32xbf16>
    %97 = vector.shape_cast %96 : vector<1x32x32xbf16> to vector<32x32xbf16>
    %cst_83 = arith.constant dense<0.000000e+00> : vector<16x32xf32>
    %98 = tpu.matmul %95, %97, %cst_83 {dimension_numbers = #tpu.dot_dimension_numbers<[1], [0], [0], [1], [0, 0, 1, 1], [], []>} : vector<16x32xbf16>, vector<32x32xbf16>, vector<16x32xf32> -> vector<16x32xf32>
    %99 = arith.addf %94, %98 : vector<16x32xf32>
    %c8_84 = arith.constant 8 : index
    %c0_85 = arith.constant 0 : index
    %100 = vector.load %arg11[%c8_84, %c0_85] : memref<32x32xbf16, #tpu.memory_space<vmem>>, vector<16x32xbf16>
    %c3_86 = arith.constant 3 : index
    %c0_87 = arith.constant 0 : index
    %c0_88 = arith.constant 0 : index
    %101 = vector.load %arg8[%c3_86, %c0_87, %c0_88] : memref<7x32x32xbf16, #tpu.memory_space<vmem>>, vector<1x32x32xbf16>
    %102 = vector.shape_cast %101 : vector<1x32x32xbf16> to vector<32x32xbf16>
    %cst_89 = arith.constant dense<0.000000e+00> : vector<16x32xf32>
    %103 = tpu.matmul %100, %102, %cst_89 {dimension_numbers = #tpu.dot_dimension_numbers<[1], [0], [0], [1], [0, 0, 1, 1], [], []>} : vector<16x32xbf16>, vector<32x32xbf16>, vector<16x32xf32> -> vector<16x32xf32>
    %104 = arith.addf %99, %103 : vector<16x32xf32>
    %c9_90 = arith.constant 9 : index
    %c0_91 = arith.constant 0 : index
    %105 = vector.load %arg11[%c9_90, %c0_91] : memref<32x32xbf16, #tpu.memory_space<vmem>>, vector<16x32xbf16>
    %c4_92 = arith.constant 4 : index
    %c0_93 = arith.constant 0 : index
    %c0_94 = arith.constant 0 : index
    %106 = vector.load %arg8[%c4_92, %c0_93, %c0_94] : memref<7x32x32xbf16, #tpu.memory_space<vmem>>, vector<1x32x32xbf16>
    %107 = vector.shape_cast %106 : vector<1x32x32xbf16> to vector<32x32xbf16>
    %cst_95 = arith.constant dense<0.000000e+00> : vector<16x32xf32>
    %108 = tpu.matmul %105, %107, %cst_95 {dimension_numbers = #tpu.dot_dimension_numbers<[1], [0], [0], [1], [0, 0, 1, 1], [], []>} : vector<16x32xbf16>, vector<32x32xbf16>, vector<16x32xf32> -> vector<16x32xf32>
    %109 = arith.addf %104, %108 : vector<16x32xf32>
    %c10_96 = arith.constant 10 : index
    %c0_97 = arith.constant 0 : index
    %110 = vector.load %arg11[%c10_96, %c0_97] : memref<32x32xbf16, #tpu.memory_space<vmem>>, vector<16x32xbf16>
    %c5_98 = arith.constant 5 : index
    %c0_99 = arith.constant 0 : index
    %c0_100 = arith.constant 0 : index
    %111 = vector.load %arg8[%c5_98, %c0_99, %c0_100] : memref<7x32x32xbf16, #tpu.memory_space<vmem>>, vector<1x32x32xbf16>
    %112 = vector.shape_cast %111 : vector<1x32x32xbf16> to vector<32x32xbf16>
    %cst_101 = arith.constant dense<0.000000e+00> : vector<16x32xf32>
    %113 = tpu.matmul %110, %112, %cst_101 {dimension_numbers = #tpu.dot_dimension_numbers<[1], [0], [0], [1], [0, 0, 1, 1], [], []>} : vector<16x32xbf16>, vector<32x32xbf16>, vector<16x32xf32> -> vector<16x32xf32>
    %114 = arith.addf %109, %113 : vector<16x32xf32>
    %c11 = arith.constant 11 : index
    %c0_102 = arith.constant 0 : index
    %115 = vector.load %arg11[%c11, %c0_102] : memref<32x32xbf16, #tpu.memory_space<vmem>>, vector<16x32xbf16>
    %c6_103 = arith.constant 6 : index
    %c0_104 = arith.constant 0 : index
    %c0_105 = arith.constant 0 : index
    %116 = vector.load %arg8[%c6_103, %c0_104, %c0_105] : memref<7x32x32xbf16, #tpu.memory_space<vmem>>, vector<1x32x32xbf16>
    %117 = vector.shape_cast %116 : vector<1x32x32xbf16> to vector<32x32xbf16>
    %cst_106 = arith.constant dense<0.000000e+00> : vector<16x32xf32>
    %118 = tpu.matmul %115, %117, %cst_106 {dimension_numbers = #tpu.dot_dimension_numbers<[1], [0], [0], [1], [0, 0, 1, 1], [], []>} : vector<16x32xbf16>, vector<32x32xbf16>, vector<16x32xf32> -> vector<16x32xf32>
    %119 = arith.addf %114, %118 : vector<16x32xf32>
    %c0_107 = arith.constant 0 : index
    %c0_108 = arith.constant 0 : index
    %120 = vector.load %arg9[%c0_107, %c0_108] : memref<1x32xf32, #tpu.memory_space<vmem>>, vector<1x32xf32>
    %121 = vector.broadcast %120 : vector<1x32xf32> to vector<16x32xf32>
    %122 = arith.addf %119, %121 : vector<16x32xf32>
    %123 = arith.addf %25, %122 : vector<16x32xf32>
    %cst_109 = arith.constant 5.000000e-01 : f32
    %124 = vector.broadcast %cst_109 : f32 to vector<16x32xf32>
    %125 = arith.mulf %123, %124 : vector<16x32xf32>
    %126 = vector.shape_cast %125 : vector<16x32xf32> to vector<1x16x32xf32>
    %c0_110 = arith.constant 0 : index
    %c0_111 = arith.constant 0 : index
    %c0_112 = arith.constant 0 : index
    %127 = vector.load %arg10[%c0_110, %c0_111, %c0_112] : memref<1x16x32xf32, #tpu.memory_space<vmem>>, vector<1x16x32xf32>
    tpu.vector_store %arg10[%c0_110, %c0_111, %c0_112], %126 {strides = array<i32>} : memref<1x16x32xf32, #tpu.memory_space<vmem>>, vector<1x16x32xf32>,
    return
  }
  func.func @transform_0(%arg0: i32) -> (i32, i32, i32) {
    %c0_i32 = arith.constant 0 : i32
    %c0_i32_0 = arith.constant 0 : i32
    %c0_i32_1 = arith.constant 0 : i32
    return %arg0, %c0_i32, %c0_i32_0 : i32, i32, i32
  }
  func.func @transform_1(%arg0: i32) -> (i32, i32) {
    %c0_i32 = arith.constant 0 : i32
    %c0_i32_0 = arith.constant 0 : i32
    %c0_i32_1 = arith.constant 0 : i32
    return %c0_i32, %c0_i32_0 : i32, i32
  }
  func.func @transform_2(%arg0: i32) -> (i32, i32) {
    %c0_i32 = arith.constant 0 : i32
    %c0_i32_0 = arith.constant 0 : i32
    %c0_i32_1 = arith.constant 0 : i32
    return %c0_i32, %c0_i32_0 : i32, i32
  }
  func.func @transform_3(%arg0: i32) -> (i32, i32, i32) {
    %c0_i32 = arith.constant 0 : i32
    %c0_i32_0 = arith.constant 0 : i32
    %c0_i32_1 = arith.constant 0 : i32
    %c0_i32_2 = arith.constant 0 : i32
    return %c0_i32, %c0_i32_0, %c0_i32_1 : i32, i32, i32
  }
  func.func @transform_4(%arg0: i32) -> (i32, i32) {
    %c0_i32 = arith.constant 0 : i32
    %c0_i32_0 = arith.constant 0 : i32
    %c0_i32_1 = arith.constant 0 : i32
    return %c0_i32, %c0_i32_0 : i32, i32
  }
  func.func @transform_5(%arg0: i32) -> (i32, i32, i32) {
    %c0_i32 = arith.constant 0 : i32
    %c0_i32_0 = arith.constant 0 : i32
    %c0_i32_1 = arith.constant 0 : i32
    %c0_i32_2 = arith.constant 0 : i32
    return %c0_i32, %c0_i32_0, %c0_i32_1 : i32, i32, i32
  }
  func.func @transform_6(%arg0: i32) -> (i32, i32) {
    %c0_i32 = arith.constant 0 : i32
    %c0_i32_0 = arith.constant 0 : i32
    %c0_i32_1 = arith.constant 0 : i32
    return %c0_i32, %c0_i32_0 : i32, i32
  }
  func.func @transform_7(%arg0: i32) -> (i32, i32, i32) {
    %c0_i32 = arith.constant 0 : i32
    %c0_i32_0 = arith.constant 0 : i32
    %c0_i32_1 = arith.constant 0 : i32
    %c0_i32_2 = arith.constant 0 : i32
    return %c0_i32, %c0_i32_0, %c0_i32_1 : i32, i32, i32
  }
  func.func @transform_8(%arg0: i32) -> (i32, i32) {
    %c0_i32 = arith.constant 0 : i32
    %c0_i32_0 = arith.constant 0 : i32
    %c0_i32_1 = arith.constant 0 : i32
    return %c0_i32, %c0_i32_0 : i32, i32
  }
  func.func @transform_9(%arg0: i32) -> (i32, i32, i32) {
    %c0_i32 = arith.constant 0 : i32
    %c0_i32_0 = arith.constant 0 : i32
    %c0_i32_1 = arith.constant 0 : i32
    return %arg0, %c0_i32, %c0_i32_0 : i32, i32, i32
  }
}

</mosaic_0001>

<llo_original>
// kernel: protein_cnn_forward.1
$region0: #{protein_cnn_forward.1}
  #allocation0 [shape = 'u32[]', space=smem, size = 0x4, offset = 0x4, fixed_abs, tag = 'smem constant byte address 0x4 - core index']
  #allocation1 [shape = 'u32[144,128]{1,0:T(1,128)}', space=vmem, size = 0x12000, scoped, tag = 'internal scratch']
  #allocation2 [shape = 'bf16[32,32]{1,0:T(8,128)(2,1)}', space=vmem, size = 0x2000, scoped, tag = 'scratch operand']
  %s0 = inlined_call_operand.vmem [shape: f32[2,16,32], index: 0, kind: input, shape index: {}]
  %s1 = inlined_call_operand.vmem [shape: f32[1,32], index: 1, kind: input, shape index: {}]
  %s2 = inlined_call_operand.vmem [shape: f32[1,32], index: 2, kind: input, shape index: {}]
  %s3 = inlined_call_operand.vmem [shape: bf16[3,32,32], index: 3, kind: input, shape index: {}]
  %s4 = inlined_call_operand.vmem [shape: f32[1,32], index: 4, kind: input, shape index: {}]
  %s5 = inlined_call_operand.vmem [shape: bf16[5,32,32], index: 5, kind: input, shape index: {}]
  %s6 = inlined_call_operand.vmem [shape: f32[1,32], index: 6, kind: input, shape index: {}]
  %s7 = inlined_call_operand.vmem [shape: bf16[7,32,32], index: 7, kind: input, shape index: {}]
  %s8 = inlined_call_operand.vmem [shape: f32[1,32], index: 8, kind: input, shape index: {}]
  %s9 = inlined_call_operand.hbm [shape: f32[2,16,32], index: 9, kind: output, shape index: {}]
  %s10 = sld [smem:[#allocation0]]
  $region69: #{protein_cnn_forward.1} parent=0
    _
  %s12 = ssub.s32 1, %s10
  %s13 = scalar_select 0, %s12, %s10
  $region1: #{protein_cnn_forward.1} parent=0
    #allocation3 [shape = 'u8[16384]{0}', space=vmem, size = 0x4000, scoped, tag = 'output window, operand 0']
    #allocation4 [shape = 's32[2]{0}', space=sflag, size = 0x8, scoped, tag = 'scoped memory for protein_cnn_forward.1']
    %14 = vsyncpa [#allocation4], 0
    %s15 = scalar_lea.sflag [#allocation4], 1
    %16 = vsyncpa %s15, 0
    loop: start=0, step=1, limit=4
    $region2: #{protein_cnn_forward.1} parent=1 // loop_pre_header
      _
    $region3: #{protein_cnn_forward.1} parent=1 // loop_header
      %s18 = sphi 0, %s22
      %p19 = scmp.ge.s32.totalorder %s18, 4
      %s28 = sphi 0, %s30
      %s31 = sphi 0, %s28
      %s32 = sphi 0, %s31
      %s48 = sphi 0, %s32
      %s52 = sphi 0, %s52
      %s54 = sphi 0, %s52
      %s55 = sphi 0, %s54
      %s69 = sphi 0, %s55
      %s73 = sphi 0, %s73
      %s75 = sphi 0, %s73
      %s76 = sphi 0, %s75
      %s90 = sphi 0, %s76
      %s94 = sphi 0, %s94
      %s96 = sphi 0, %s94
      %s97 = sphi 0, %s96
      %s111 = sphi 0, %s97
      %s115 = sphi 0, %s115
      %s117 = sphi 0, %s115
      %s118 = sphi 0, %s117
      %s132 = sphi 0, %s118
      %s136 = sphi 0, %s136
      %s138 = sphi 0, %s136
      %s139 = sphi 0, %s138
      %s153 = sphi 0, %s139
      %s157 = sphi 0, %s157
      %s159 = sphi 0, %s157
      %s160 = sphi 0, %s159
      %s174 = sphi 0, %s160
      %s178 = sphi 0, %s178
      %s180 = sphi 0, %s178
      %s181 = sphi 0, %s180
      %s195 = sphi 0, %s181
      %s199 = sphi 0, %s199
      %s201 = sphi 0, %s199
      %s202 = sphi 0, %s201
      %s216 = sphi 0, %s202
      %s222 = sphi 0, %s224
      %s225 = sphi 0, %s222
      %s226 = sphi 0, %s225
      %s242 = sphi 0, %s226
    $region4: #{protein_cnn_forward.1} parent=1 // loop_header_branch
      %21 = sbr.rel (%p19) target = $region8
    $region5: #{protein_cnn_forward.1} parent=1 // loop_body
      %s23 = ssub.s32 %s18, 1
      %s24 = ssub.s32 %s18, 2
      %s25 = sadd.s32 %s18, 1
      %s26 = ssub.s32 %s18, %s25
      %p27 = scmp.eq.s32.totalorder %s26, 0
      %s29 = sadd.s32 %s28, 1
      %s30 = scalar_select %p27, %s28, %s29
      %p33 = pneg %p27
      %p34 = scmp.eq.s32.totalorder %s18, 1
      %p35 = por %p33, %p34
      %p36 = scmp.ne.s32.totalorder %s28, %s31
      %p37 = scmp.eq.s32.totalorder %s18, 0
      %p38 = por %p36, %p37
      %p39 = scmp.ne.s32.totalorder %s28, %s31
      %p40 = scmp.eq.s32.totalorder %s23, 1
      %p41 = por %p39, %p40
      %p42 = scmp.ne.s32.totalorder %s31, %s32
      %p43 = scmp.eq.s32.totalorder %s23, 0
      %p44 = por %p42, %p43
      %p45 = scmp.ne.s32.totalorder %s31, %s32
      %p46 = scmp.eq.s32.totalorder %s24, 1
      %p47 = por %p45, %p46
      %p49 = scmp.ne.s32.totalorder %s32, %s48
      %p50 = scmp.eq.s32.totalorder %s24, 0
      %p51 = por %p49, %p50
      %s53 = sadd.s32 %s52, 1
      %p56 = scmp.eq.s32.totalorder %s18, 1
      %p57 = scmp.ne.s32.totalorder %s52, %s54
      %p58 = scmp.eq.s32.totalorder %s18, 0
      %p59 = por %p57, %p58
      %p60 = scmp.ne.s32.totalorder %s52, %s54
      %p61 = scmp.eq.s32.totalorder %s23, 1
      %p62 = por %p60, %p61
      %p63 = scmp.ne.s32.totalorder %s54, %s55
      %p64 = scmp.eq.s32.totalorder %s23, 0
      %p65 = por %p63, %p64
      %p66 = scmp.ne.s32.totalorder %s54, %s55
      %p67 = scmp.eq.s32.totalorder %s24, 1
      %p68 = por %p66, %p67
      %p70 = scmp.ne.s32.totalorder %s55, %s69
      %p71 = scmp.eq.s32.totalorder %s24, 0
      %p72 = por %p70, %p71
      %s74 = sadd.s32 %s73, 1
      %p77 = scmp.eq.s32.totalorder %s18, 1
      %p78 = scmp.ne.s32.totalorder %s73, %s75
      %p79 = scmp.eq.s32.totalorder %s18, 0
      %p80 = por %p78, %p79
      %p81 = scmp.ne.s32.totalorder %s73, %s75
      %p82 = scmp.eq.s32.totalorder %s23, 1
      %p83 = por %p81, %p82
      %p84 = scmp.ne.s32.totalorder %s75, %s76
      %p85 = scmp.eq.s32.totalorder %s23, 0
      %p86 = por %p84, %p85
      %p87 = scmp.ne.s32.totalorder %s75, %s76
      %p88 = scmp.eq.s32.totalorder %s24, 1
      %p89 = por %p87, %p88
      %p91 = scmp.ne.s32.totalorder %s76, %s90
      %p92 = scmp.eq.s32.totalorder %s24, 0
      %p93 = por %p91, %p92
      %s95 = sadd.s32 %s94, 1
      %p98 = scmp.eq.s32.totalorder %s18, 1
      %p99 = scmp.ne.s32.totalorder %s94, %s96
      %p100 = scmp.eq.s32.totalorder %s18, 0
      %p101 = por %p99, %p100
      %p102 = scmp.ne.s32.totalorder %s94, %s96
      %p103 = scmp.eq.s32.totalorder %s23, 1
      %p104 = por %p102, %p103
      %p105 = scmp.ne.s32.totalorder %s96, %s97
      %p106 = scmp.eq.s32.totalorder %s23, 0
      %p107 = por %p105, %p106
      %p108 = scmp.ne.s32.totalorder %s96, %s97
      %p109 = scmp.eq.s32.totalorder %s24, 1
      %p110 = por %p108, %p109
      %p112 = scmp.ne.s32.totalorder %s97, %s111
      %p113 = scmp.eq.s32.totalorder %s24, 0
      %p114 = por %p112, %p113
      %s116 = sadd.s32 %s115, 1
      %p119 = scmp.eq.s32.totalorder %s18, 1
      %p120 = scmp.ne.s32.totalorder %s115, %s117
      %p121 = scmp.eq.s32.totalorder %s18, 0
      %p122 = por %p120, %p121
      %p123 = scmp.ne.s32.totalorder %s115, %s117
      %p124 = scmp.eq.s32.totalorder %s23, 1
      %p125 = por %p123, %p124
      %p126 = scmp.ne.s32.totalorder %s117, %s118
      %p127 = scmp.eq.s32.totalorder %s23, 0
      %p128 = por %p126, %p127
      %p129 = scmp.ne.s32.totalorder %s117, %s118
      %p130 = scmp.eq.s32.totalorder %s24, 1
      %p131 = por %p129, %p130
      %p133 = scmp.ne.s32.totalorder %s118, %s132
      %p134 = scmp.eq.s32.totalorder %s24, 0
      %p135 = por %p133, %p134
      %s137 = sadd.s32 %s136, 1
      %p140 = scmp.eq.s32.totalorder %s18, 1
      %p141 = scmp.ne.s32.totalorder %s136, %s138
      %p142 = scmp.eq.s32.totalorder %s18, 0
      %p143 = por %p141, %p142
      %p144 = scmp.ne.s32.totalorder %s136, %s138
      %p145 = scmp.eq.s32.totalorder %s23, 1
      %p146 = por %p144, %p145
      %p147 = scmp.ne.s32.totalorder %s138, %s139
      %p148 = scmp.eq.s32.totalorder %s23, 0
      %p149 = por %p147, %p148
      %p150 = scmp.ne.s32.totalorder %s138, %s139
      %p151 = scmp.eq.s32.totalorder %s24, 1
      %p152 = por %p150, %p151
      %p154 = scmp.ne.s32.totalorder %s139, %s153
      %p155 = scmp.eq.s32.totalorder %s24, 0
      %p156 = por %p154, %p155
      %s158 = sadd.s32 %s157, 1
      %p161 = scmp.eq.s32.totalorder %s18, 1
      %p162 = scmp.ne.s32.totalorder %s157, %s159
      %p163 = scmp.eq.s32.totalorder %s18, 0
      %p164 = por %p162, %p163
      %p165 = scmp.ne.s32.totalorder %s157, %s159
      %p166 = scmp.eq.s32.totalorder %s23, 1
      %p167 = por %p165, %p166
      %p168 = scmp.ne.s32.totalorder %s159, %s160
      %p169 = scmp.eq.s32.totalorder %s23, 0
      %p170 = por %p168, %p169
      %p171 = scmp.ne.s32.totalorder %s159, %s160
      %p172 = scmp.eq.s32.totalorder %s24, 1
      %p173 = por %p171, %p172
      %p175 = scmp.ne.s32.totalorder %s160, %s174
      %p176 = scmp.eq.s32.totalorder %s24, 0
      %p177 = por %p175, %p176
      %s179 = sadd.s32 %s178, 1
      %p182 = scmp.eq.s32.totalorder %s18, 1
      %p183 = scmp.ne.s32.totalorder %s178, %s180
      %p184 = scmp.eq.s32.totalorder %s18, 0
      %p185 = por %p183, %p184
      %p186 = scmp.ne.s32.totalorder %s178, %s180
      %p187 = scmp.eq.s32.totalorder %s23, 1
      %p188 = por %p186, %p187
      %p189 = scmp.ne.s32.totalorder %s180, %s181
      %p190 = scmp.eq.s32.totalorder %s23, 0
      %p191 = por %p189, %p190
      %p192 = scmp.ne.s32.totalorder %s180, %s181
      %p193 = scmp.eq.s32.totalorder %s24, 1
      %p194 = por %p192, %p193
      %p196 = scmp.ne.s32.totalorder %s181, %s195
      %p197 = scmp.eq.s32.totalorder %s24, 0
      %p198 = por %p196, %p197
      %s200 = sadd.s32 %s199, 1
      %p203 = scmp.eq.s32.totalorder %s18, 1
      %p204 = scmp.ne.s32.totalorder %s199, %s201
      %p205 = scmp.eq.s32.totalorder %s18, 0
      %p206 = por %p204, %p205
      %p207 = scmp.ne.s32.totalorder %s199, %s201
      %p208 = scmp.eq.s32.totalorder %s23, 1
      %p209 = por %p207, %p208
      %p210 = scmp.ne.s32.totalorder %s201, %s202
      %p211 = scmp.eq.s32.totalorder %s23, 0
      %p212 = por %p210, %p211
      %p213 = scmp.ne.s32.totalorder %s201, %s202
      %p214 = scmp.eq.s32.totalorder %s24, 1
      %p215 = por %p213, %p214
      %p217 = scmp.ne.s32.totalorder %s202, %s216
      %p218 = scmp.eq.s32.totalorder %s24, 0
      %p219 = por %p217, %p218
      %s220 = ssub.s32 %s18, %s25
      %p221 = scmp.eq.s32.totalorder %s220, 0
      %s223 = sadd.s32 %s222, 1
      %s224 = scalar_select %p221, %s222, %s223
      %p227 = pneg %p221
      %p228 = scmp.eq.s32.totalorder %s18, 1
      %p229 = por %p227, %p228
      %p230 = scmp.ne.s32.totalorder %s222, %s225
      %p231 = scmp.eq.s32.totalorder %s18, 0
      %p232 = por %p230, %p231
      %p233 = scmp.ne.s32.totalorder %s222, %s225
      %p234 = scmp.eq.s32.totalorder %s23, 1
      %p235 = por %p233, %p234
      %p236 = scmp.ne.s32.totalorder %s225, %s226
      %p237 = scmp.eq.s32.totalorder %s23, 0
      %p238 = por %p236, %p237
      %p239 = scmp.ne.s32.totalorder %s225, %s226
      %p240 = scmp.eq.s32.totalorder %s24, 1
      %p241 = por %p239, %p240
      %p243 = scmp.ne.s32.totalorder %s226, %s242
      %p244 = scmp.eq.s32.totalorder %s24, 0
      %p245 = por %p243, %p244
      %p246 = scmp.le.s32.totalorder 1, %s18
      %p247 = scmp.lt.s32.totalorder %s18, 3
      %p248 = pnand %p246, %p247
      %p249 = pneg %p248
      // Predicated region
      $region9: #{protein_cnn_forward.1} parent=5 // pred_check
        _
      $region10: #{protein_cnn_forward.1} parent=5 // pred_check_branch
        %251 = sbr.rel (%p248) target = $region12
      $region11: #{protein_cnn_forward.1} parent=5 // pred_region
        %s252 = ssub.s32 %s18, 1
        // Predicated region
        $region13: #{protein_cnn_forward.1} parent=11 // pred_check
          %p253 = pneg %p65
        $region14: #{protein_cnn_forward.1} parent=11 // pred_check_branch
          %255 = sbr.rel (%p253) target = $region16
        $region15: #{protein_cnn_forward.1} parent=11 // pred_region
          _
        $region16: #{protein_cnn_forward.1} parent=11 // pred_fallthru
          _
        // Predicated region
        $region17: #{protein_cnn_forward.1} parent=11 // pred_check
          %p256 = pneg %p86
        $region18: #{protein_cnn_forward.1} parent=11 // pred_check_branch
          %258 = sbr.rel (%p256) target = $region20
        $region19: #{protein_cnn_forward.1} parent=11 // pred_region
          _
        $region20: #{protein_cnn_forward.1} parent=11 // pred_fallthru
          _
        // Predicated region
        $region21: #{protein_cnn_forward.1} parent=11 // pred_check
          %p259 = pneg %p107
        $region22: #{protein_cnn_forward.1} parent=11 // pred_check_branch
          %261 = sbr.rel (%p259) target = $region24
        $region23: #{protein_cnn_forward.1} parent=11 // pred_region
          _
        $region24: #{protein_cnn_forward.1} parent=11 // pred_fallthru
          _
        // Predicated region
        $region25: #{protein_cnn_forward.1} parent=11 // pred_check
          %p262 = pneg %p128
        $region26: #{protein_cnn_forward.1} parent=11 // pred_check_branch
          %264 = sbr.rel (%p262) target = $region28
        $region27: #{protein_cnn_forward.1} parent=11 // pred_region
          _
        $region28: #{protein_cnn_forward.1} parent=11 // pred_fallthru
          _
        // Predicated region
        $region29: #{protein_cnn_forward.1} parent=11 // pred_check
          %p265 = pneg %p149
        $region30: #{protein_cnn_forward.1} parent=11 // pred_check_branch
          %267 = sbr.rel (%p265) target = $region32
        $region31: #{protein_cnn_forward.1} parent=11 // pred_region
          _
        $region32: #{protein_cnn_forward.1} parent=11 // pred_fallthru
          _
        // Predicated region
        $region33: #{protein_cnn_forward.1} parent=11 // pred_check
          %p268 = pneg %p170
        $region34: #{protein_cnn_forward.1} parent=11 // pred_check_branch
          %270 = sbr.rel (%p268) target = $region36
        $region35: #{protein_cnn_forward.1} parent=11 // pred_region
          _
        $region36: #{protein_cnn_forward.1} parent=11 // pred_fallthru
          _
        // Predicated region
        $region37: #{protein_cnn_forward.1} parent=11 // pred_check
          %p271 = pneg %p191
        $region38: #{protein_cnn_forward.1} parent=11 // pred_check_branch
          %273 = sbr.rel (%p271) target = $region40
        $region39: #{protein_cnn_forward.1} parent=11 // pred_region
          _
        $region40: #{protein_cnn_forward.1} parent=11 // pred_fallthru
          _
        // Predicated region
        $region41: #{protein_cnn_forward.1} parent=11 // pred_check
          %p274 = pneg %p212
        $region42: #{protein_cnn_forward.1} parent=11 // pred_check_branch
          %276 = sbr.rel (%p274) target = $region44
        $region43: #{protein_cnn_forward.1} parent=11 // pred_region
          _
        $region44: #{protein_cnn_forward.1} parent=11 // pred_fallthru
          _
      $region12: #{protein_cnn_forward.1} parent=5 // pred_fallthru
        _
      %p277 = scmp.lt.s32.totalorder %s18, 2
      // Predicated region
      $region45: #{protein_cnn_forward.1} parent=5 // pred_check
        %p278 = pneg %p277
      $region46: #{protein_cnn_forward.1} parent=5 // pred_check_branch
        %280 = sbr.rel (%p278) target = $region48
      $region47: #{protein_cnn_forward.1} parent=5 // pred_region
        // Predicated region
        $region49: #{protein_cnn_forward.1} parent=47 // pred_check
          %p281 = pneg %p38
        $region50: #{protein_cnn_forward.1} parent=47 // pred_check_branch
          %283 = sbr.rel (%p281) target = $region52
        $region51: #{protein_cnn_forward.1} parent=47 // pred_region
          %p284 = scmp.lt.s32.totalorder %s18, 1
          %s285 = scalar_select %p284, %s18, 1
          %s286 = smul.addr %s285, 2
          %s287 = smul.addr %s286, 8
          %s288 = scalar_lea.vmem %s0, %s287
        $region52: #{protein_cnn_forward.1} parent=47 // pred_fallthru
          _
      $region48: #{protein_cnn_forward.1} parent=5 // pred_fallthru
        _
      %p289 = scmp.le.s32.totalorder 1, %s18
      %p290 = scmp.lt.s32.totalorder %s18, 3
      %p291 = pnand %p289, %p290
      %p292 = pneg %p291
      // Predicated region
      $region53: #{protein_cnn_forward.1} parent=5 // pred_check
        _
      $region54: #{protein_cnn_forward.1} parent=5 // pred_check_branch
        %294 = sbr.rel (%p291) target = $region56
      $region55: #{protein_cnn_forward.1} parent=5 // pred_region
        %s295 = ssub.s32 %s18, 1
        %p296 = scmp.lt.s32.totalorder %s23, 1
        %s297 = scalar_select %p296, %s23, 1
        %s298 = smul.addr %s297, 2
        %s299 = smul.addr %s298, 8
        %s300 = scalar_lea.vmem %s0, %s299
        %p301 = pneg %p44
        %p302 = pneg %p41
        %p303 = pneg %p65
        %p304 = pneg %p62
        %p305 = pneg %p86
        %p306 = pneg %p83
        %p307 = pneg %p107
        %p308 = pneg %p104
        %p309 = pneg %p128
        %p310 = pneg %p125
        %p311 = pneg %p149
        %p312 = pneg %p146
        %p313 = pneg %p170
        %p314 = pneg %p167
        %p315 = pneg %p191
        %p316 = pneg %p188
        %p317 = pneg %p212
        %p318 = pneg %p209
        %p319 = pneg %p238
        %p320 = pneg %p235
        %s321 = sand.u32 %s225, 1
        %s322 = scalar_lea.sflag [#allocation4], %s321
        %s323 = sand.u32 %s225, 1
        %s324 = smul.addr %s323, 16
        %s325 = scalar_lea.vmem [#allocation3], %s324
        %p326 = scmp.lt.s32.totalorder %s23, 1
        %s327 = scalar_select %p326, %s23, 1
        %s328 = smul.addr %s327, 2
        %s329 = smul.addr %s328, 8
        %s330 = scalar_lea.vmem %s0, %s329
        %v332 = vld [vmem:[%s330] sm:$0xff]
        %v333 = vld [vmem:[%s330 + $0x8] sm:$0xff]
        %vm334 = vcmask 261120
        %v335 = vsel %vm334, %v332, 0.0
        %336 = vadd.xlane.f32.xlu0 %v335
        %v337 = vpop.xlane.xlu0 %336
        %v338 = vsel %vm334, %v333, 0.0
        %339 = vadd.xlane.f32.xlu0 %v338
        %v340 = vpop.xlane.xlu0 %339
        %v341 = vrcp.pop 32.0
        %v342 = vmul.f32 %v337, %v341
        %v343 = vmul.f32 %v340, %v341
        %v344 = vsub.f32 %v332, %v342
        %v345 = vsub.f32 %v333, %v343
        %v346 = vmul.f32 %v344, %v344
        %v347 = vmul.f32 %v345, %v345
        %v348 = vsel %vm334, %v346, 0.0
        %349 = vadd.xlane.f32.xlu0 %v348
        %v350 = vpop.xlane.xlu0 %349
        %v351 = vsel %vm334, %v347, 0.0
        %352 = vadd.xlane.f32.xlu0 %v351
        %v353 = vpop.xlane.xlu0 %352
        %v354 = vmul.f32 %v350, %v341
        %v355 = vmul.f32 %v353, %v341
        %v356 = vadd.f32 %v354, 1e-05
        %v357 = vadd.f32 %v355, 1e-05
        %v358 = vrsqrt.pop %v356
        %v359 = vrsqrt.pop %v357
        %v360 = vmul.f32 %v344, %v358
        %v361 = vmul.f32 %v345, %v359
        %v362 = vld [vmem:[%s1] sm:$0x1]
        %v364 = vlaneseq
        %v365 = vshrl.u32 %v364, 7
        %v366 = vsub.s32 0, %v365
        %v367 = vrot.slane %v362, %v366
        %v369 = vmul.f32 %v360, %v367
        %v370 = vmul.f32 %v361, %v367
        %v371 = vld [vmem:[%s2] sm:$0x1]
        %v373 = vlaneseq
        %v374 = vshrl.u32 %v373, 7
        %v375 = vsub.s32 0, %v374
        %v376 = vrot.slane %v371, %v375
        %v378 = vadd.f32 %v369, %v376
        %v379 = vadd.f32 %v370, %v376
        %vm380 = vcmask 257024
        %381 = vst.msk [vmem:[#allocation2] sm:$0xf] %vm380, 0
        %382 = vst.msk [vmem:[#allocation2 + $0xc] sm:$0xf] %vm380, 0
        %v383 = vpack.c.bf16 %v379, %v378
        %v385 = vunpack.c.l.b16 %v383
        %v386 = vunpack.c.h.b16 %v383
        %v387 = vpack.c.b16 %v385, %v385
        %v388 = vpack.c.b16 %v386, %v386
        %391 = vst.msk [vmem:[#allocation2 + $0x4] sm:$0xf] %vm380, %v387
        %392 = vst.msk [vmem:[#allocation2 + $0x8] sm:$0xf] %vm380, %v388
        %v393 = vld [vmem:[#allocation2] sm:$0x8]
        %v394 = vld [vmem:[#allocation2 + $0x4] sm:$0xf]
        %v395 = vld [vmem:[#allocation2 + $0x8] sm:$0xf]
        %v396 = vld [vmem:[%s3] sm:$0xf]
        %v397 = vld [vmem:[%s3 + $0x4] sm:$0xf]
        %v398 = vld [vmem:[%s3 + $0x8] sm:$0xf]
        %v399 = vld [vmem:[%s3 + $0xc] sm:$0xf]
        %s400 = scalar_lea.vmem %s3, 16
        %v401 = vld [vmem:[%s400] sm:$0xf]
        %v402 = vld [vmem:[%s400 + $0x4] sm:$0xf]
        %v403 = vld [vmem:[%s400 + $0x8] sm:$0xf]
        %v404 = vld [vmem:[%s400 + $0xc] sm:$0xf]
        %v407 = vunpack.c.l.b16 %v394
        %v408 = vunpack.c.l.b16 %v395
        %v409 = vpack.c.b16 %v408, %v407
        %v414 = vunpack.c.l.b16 %v401
        %v415 = vunpack.c.l.b16 %v402
        %v416 = vunpack.c.l.b16 %v403
        %v417 = vunpack.c.l.b16 %v404
        %v418 = vpack.c.b16 %v415, %v414
        %v419 = vpack.c.b16 %v417, %v416
        %v423 = vsel %vm334, %v409, 0
        %425 = vmatprep.subr.bf16.mxu0 0
        %426 = vmatpush1.bf16.msra.mxu0 0
        %427 = vmatprep.subr.bf16.mxu0 0
        %428 = vmatpush1.bf16.msra.mxu0 0
        %429 = vmatprep.subr.bf16.mxu0 0
        %430 = vmatpush1.bf16.msra.mxu0 0
        %431 = vmatprep.subr.bf16.mxu0 0
        %432 = vmatpush1.bf16.msra.mxu0 0
        %433 = vmatprep.subr.bf16.mxu0 0
        %434 = vmatpush1.bf16.msra.mxu0 0
        %435 = vmatprep.subr.bf16.mxu0 0
        %436 = vmatpush1.bf16.msra.mxu0 0
        %437 = vmatprep.subr.bf16.mxu0 0
        %438 = vmatpush1.bf16.msra.mxu0 %v419
        %439 = vmatprep.subr.bf16.mxu0 0
        %440 = vmatpush1.bf16.msra.mxu0 %v418
        %441 = vmatprep.subr.bf16.mxu0 0
        %442 = vmatpush2.bf16.msra.mxu0 0
        %443 = vmatprep.subr.bf16.mxu0 0
        %444 = vmatpush2.bf16.msra.mxu0 0
        %445 = vmatprep.subr.bf16.mxu0 0
        %446 = vmatpush2.bf16.msra.mxu0 0
        %447 = vmatprep.subr.bf16.mxu0 0
        %448 = vmatpush2.bf16.msra.mxu0 0
        %449 = vmatprep.subr.bf16.mxu0 0
        %450 = vmatpush2.bf16.msra.mxu0 0
        %451 = vmatprep.subr.bf16.mxu0 0
        %452 = vmatpush2.bf16.msra.mxu0 0
        %453 = vmatprep.subr.bf16.mxu0 0
        %454 = vmatpush2.bf16.msra.mxu0 0
        %455 = vmatprep.subr.bf16.mxu0 0
        %456 = vmatpush2.bf16.msra.mxu0 0
        %457 = vmatprep.mubr.bf16.mxu0 0
        %458 = vmatmul.mubr.bf16.gmra.mxu0 %v423
        %v459 = vpop.f32.mrf.mxu0
        %v460 = vadd.f32 0.0, %v459
        %v461 = vpop.f32.mrf.mxu0
        %v462 = vpop.f32.mrf.mxu0
        %v463 = vadd.f32 0.0, %v462
        %v464 = vpop.f32.mrf.mxu0
        %465 = vdwg.mxu0
        %v467 = vunpack.c.l.b16 %v393
        %v468 = vpack.c.b16 %v407, %v467
        %v469 = vpack.c.b16 %v408, %v408
        %vm470 = vsmask.f32 4352
        %v472 = vshrl.u32 %v468, 16
        %v474 = vrot.slane %v472, 3
        %v475 = vshll.u32 %v468, 16
        %v477 = vrot.slane %v475, 4
        %v478 = vor.u32 %v474, %v477
        %v480 = vshrl.u32 %v469, 16
        %v482 = vrot.slane %v480, 3
        %v483 = vshll.u32 %v469, 16
        %v485 = vrot.slane %v483, 4
        %v486 = vor.u32 %v482, %v485
        %v487 = vsel %vm470, %v478, %v486
        %v492 = vunpack.c.l.b16 %v396
        %v493 = vunpack.c.l.b16 %v397
        %v494 = vunpack.c.l.b16 %v398
        %v495 = vunpack.c.l.b16 %v399
        %v496 = vpack.c.b16 %v493, %v492
        %v497 = vpack.c.b16 %v495, %v494
        %v501 = vsel %vm334, %v487, 0
        %503 = vmatprep.subr.bf16.mxu0 0
        %504 = vmatpush1.bf16.msra.mxu0 0
        %505 = vmatprep.subr.bf16.mxu0 0
        %506 = vmatpush1.bf16.msra.mxu0 0
        %507 = vmatprep.subr.bf16.mxu0 0
        %508 = vmatpush1.bf16.msra.mxu0 0
        %509 = vmatprep.subr.bf16.mxu0 0
        %510 = vmatpush1.bf16.msra.mxu0 0
        %511 = vmatprep.subr.bf16.mxu0 0
        %512 = vmatpush1.bf16.msra.mxu0 0
        %513 = vmatprep.subr.bf16.mxu0 0
        %514 = vmatpush1.bf16.msra.mxu0 0
        %515 = vmatprep.subr.bf16.mxu0 0
        %516 = vmatpush1.bf16.msra.mxu0 %v497
        %517 = vmatprep.subr.bf16.mxu0 0
        %518 = vmatpush1.bf16.msra.mxu0 %v496
        %519 = vmatprep.subr.bf16.mxu0 0
        %520 = vmatpush2.bf16.msra.mxu0 0
        %521 = vmatprep.subr.bf16.mxu0 0
        %522 = vmatpush2.bf16.msra.mxu0 0
        %523 = vmatprep.subr.bf16.mxu0 0
        %524 = vmatpush2.bf16.msra.mxu0 0
        %525 = vmatprep.subr.bf16.mxu0 0
        %526 = vmatpush2.bf16.msra.mxu0 0
        %527 = vmatprep.subr.bf16.mxu0 0
        %528 = vmatpush2.bf16.msra.mxu0 0
        %529 = vmatprep.subr.bf16.mxu0 0
        %530 = vmatpush2.bf16.msra.mxu0 0
        %531 = vmatprep.subr.bf16.mxu0 0
        %532 = vmatpush2.bf16.msra.mxu0 0
        %533 = vmatprep.subr.bf16.mxu0 0
        %534 = vmatpush2.bf16.msra.mxu0 0
        %535 = vmatprep.mubr.bf16.mxu0 0
        %536 = vmatmul.mubr.bf16.gmra.mxu0 %v501
        %v537 = vpop.f32.mrf.mxu0
        %v538 = vadd.f32 %v460, %v537
        %v539 = vpop.f32.mrf.mxu0
        %v540 = vpop.f32.mrf.mxu0
        %v541 = vadd.f32 %v463, %v540
        %v542 = vpop.f32.mrf.mxu0
        %543 = vdwg.mxu0
        %v544 = vld [vmem:[#allocation2 + $0x4] sm:$0xf]
        %v545 = vld [vmem:[#allocation2 + $0x8] sm:$0xf]
        %v546 = vld [vmem:[#allocation2 + $0xc] sm:$0x1]
        %s547 = scalar_lea.vmem %s3, 32
        %v548 = vld [vmem:[%s547] sm:$0xf]
        %v549 = vld [vmem:[%s547 + $0x4] sm:$0xf]
        %v550 = vld [vmem:[%s547 + $0x8] sm:$0xf]
        %v551 = vld [vmem:[%s547 + $0xc] sm:$0xf]
        %v555 = vunpack.c.l.b16 %v544
        %v556 = vunpack.c.l.b16 %v545
        %v557 = vunpack.c.l.b16 %v546
        %v558 = vpack.c.b16 %v556, %v555
        %v559 = vpack.c.b16 %v557, %v557
        %vm560 = vsmask.f32 7424
        %v562 = vshrl.u32 %v558, 16
        %v564 = vshll.u32 %v558, 16
        %v566 = vrot.slane %v564, 1
        %v567 = vor.u32 %v562, %v566
        %v569 = vshll.u32 %v559, 16
        %v571 = vrot.slane %v569, 1
        %v572 = vsel %vm560, %v567, %v571
        %v577 = vunpack.c.l.b16 %v548
        %v578 = vunpack.c.l.b16 %v549
        %v579 = vunpack.c.l.b16 %v550
        %v580 = vunpack.c.l.b16 %v551
        %v581 = vpack.c.b16 %v578, %v577
        %v582 = vpack.c.b16 %v580, %v579
        %v586 = vsel %vm334, %v572, 0
        %588 = vmatprep.subr.bf16.mxu0 0
        %589 = vmatpush1.bf16.msra.mxu0 0
        %590 = vmatprep.subr.bf16.mxu0 0
        %591 = vmatpush1.bf16.msra.mxu0 0
        %592 = vmatprep.subr.bf16.mxu0 0
        %593 = vmatpush1.bf16.msra.mxu0 0
        %594 = vmatprep.subr.bf16.mxu0 0
        %595 = vmatpush1.bf16.msra.mxu0 0
        %596 = vmatprep.subr.bf16.mxu0 0
        %597 = vmatpush1.bf16.msra.mxu0 0
        %598 = vmatprep.subr.bf16.mxu0 0
        %599 = vmatpush1.bf16.msra.mxu0 0
        %600 = vmatprep.subr.bf16.mxu0 0
        %601 = vmatpush1.bf16.msra.mxu0 %v582
        %602 = vmatprep.subr.bf16.mxu0 0
        %603 = vmatpush1.bf16.msra.mxu0 %v581
        %604 = vmatprep.subr.bf16.mxu0 0
        %605 = vmatpush2.bf16.msra.mxu0 0
        %606 = vmatprep.subr.bf16.mxu0 0
        %607 = vmatpush2.bf16.msra.mxu0 0
        %608 = vmatprep.subr.bf16.mxu0 0
        %609 = vmatpush2.bf16.msra.mxu0 0
        %610 = vmatprep.subr.bf16.mxu0 0
        %611 = vmatpush2.bf16.msra.mxu0 0
        %612 = vmatprep.subr.bf16.mxu0 0
        %613 = vmatpush2.bf16.msra.mxu0 0
        %614 = vmatprep.subr.bf16.mxu0 0
        %615 = vmatpush2.bf16.msra.mxu0 0
        %616 = vmatprep.subr.bf16.mxu0 0
        %617 = vmatpush2.bf16.msra.mxu0 0
        %618 = vmatprep.subr.bf16.mxu0 0
        %619 = vmatpush2.bf16.msra.mxu0 0
        %620 = vmatprep.mubr.bf16.mxu0 0
        %621 = vmatmul.mubr.bf16.gmra.mxu0 %v586
        %v622 = vpop.f32.mrf.mxu0
        %v623 = vadd.f32 0.0, %v622
        %v624 = vpop.f32.mrf.mxu0
        %v625 = vpop.f32.mrf.mxu0
        %v626 = vadd.f32 0.0, %v625
        %v627 = vpop.f32.mrf.mxu0
        %628 = vdwg.mxu0
        %v629 = vadd.f32 %v538, %v623
        %v630 = vadd.f32 %v541, %v626
        %v631 = vld [vmem:[%s4] sm:$0x1]
        %v633 = vlaneseq
        %v634 = vshrl.u32 %v633, 7
        %v635 = vsub.s32 0, %v634
        %v636 = vrot.slane %v631, %v635
        %v638 = vadd.f32 %v629, %v636
        %v639 = vadd.f32 %v630, %v636
        %v640 = vpack.c.bf16 %v639, %v638
        %v642 = vunpack.c.l.b16 %v640
        %v643 = vunpack.c.h.b16 %v640
        %v644 = vpack.c.b16 %v642, %v642
        %v645 = vpack.c.b16 %v643, %v643
        %648 = vst.msk [vmem:[#allocation2 + $0x4] sm:$0xf] %vm380, %v644
        %649 = vst.msk [vmem:[#allocation2 + $0x8] sm:$0xf] %vm380, %v645
        %v650 = vld [vmem:[#allocation2] sm:$0x8]
        %v651 = vld [vmem:[#allocation2 + $0x4] sm:$0xf]
        %v652 = vld [vmem:[#allocation2 + $0x8] sm:$0x7]
        %v653 = vld [vmem:[%s5] sm:$0xf]
        %v654 = vld [vmem:[%s5 + $0x4] sm:$0xf]
        %v655 = vld [vmem:[%s5 + $0x8] sm:$0xf]
        %v656 = vld [vmem:[%s5 + $0xc] sm:$0xf]
        %v657 = vld [vmem:[#allocation2 + $0x8] sm:$0xf]
        %s658 = scalar_lea.vmem %s5, 16
        %v659 = vld [vmem:[%s658] sm:$0xf]
        %v660 = vld [vmem:[%s658 + $0x4] sm:$0xf]
        %v661 = vld [vmem:[%s658 + $0x8] sm:$0xf]
        %v662 = vld [vmem:[%s658 + $0xc] sm:$0xf]
        %v666 = vunpack.c.l.b16 %v650
        %v667 = vunpack.c.l.b16 %v651
        %v668 = vunpack.c.l.b16 %v657
        %v669 = vpack.c.b16 %v667, %v666
        %v670 = vpack.c.b16 %v668, %v668
        %v672 = vshrl.u32 %v669, 16
        %v674 = vrot.slane %v672, 3
        %v675 = vshll.u32 %v669, 16
        %v677 = vrot.slane %v675, 4
        %v678 = vor.u32 %v674, %v677
        %v680 = vshrl.u32 %v670, 16
        %v682 = vrot.slane %v680, 3
        %v683 = vshll.u32 %v670, 16
        %v685 = vrot.slane %v683, 4
        %v686 = vor.u32 %v682, %v685
        %v687 = vsel %vm470, %v678, %v686
        %v692 = vunpack.c.l.b16 %v659
        %v693 = vunpack.c.l.b16 %v660
        %v694 = vunpack.c.l.b16 %v661
        %v695 = vunpack.c.l.b16 %v662
        %v696 = vpack.c.b16 %v693, %v692
        %v697 = vpack.c.b16 %v695, %v694
        %v701 = vsel %vm334, %v687, 0
        %703 = vmatprep.subr.bf16.mxu0 0
        %704 = vmatpush1.bf16.msra.mxu0 0
        %705 = vmatprep.subr.bf16.mxu0 0
        %706 = vmatpush1.bf16.msra.mxu0 0
        %707 = vmatprep.subr.bf16.mxu0 0
        %708 = vmatpush1.bf16.msra.mxu0 0
        %709 = vmatprep.subr.bf16.mxu0 0
        %710 = vmatpush1.bf16.msra.mxu0 0
        %711 = vmatprep.subr.bf16.mxu0 0
        %712 = vmatpush1.bf16.msra.mxu0 0
        %713 = vmatprep.subr.bf16.mxu0 0
        %714 = vmatpush1.bf16.msra.mxu0 0
        %715 = vmatprep.subr.bf16.mxu0 0
        %716 = vmatpush1.bf16.msra.mxu0 %v697
        %717 = vmatprep.subr.bf16.mxu0 0
        %718 = vmatpush1.bf16.msra.mxu0 %v696
        %719 = vmatprep.subr.bf16.mxu0 0
        %720 = vmatpush2.bf16.msra.mxu0 0
        %721 = vmatprep.subr.bf16.mxu0 0
        %722 = vmatpush2.bf16.msra.mxu0 0
        %723 = vmatprep.subr.bf16.mxu0 0
        %724 = vmatpush2.bf16.msra.mxu0 0
        %725 = vmatprep.subr.bf16.mxu0 0
        %726 = vmatpush2.bf16.msra.mxu0 0
        %727 = vmatprep.subr.bf16.mxu0 0
        %728 = vmatpush2.bf16.msra.mxu0 0
        %729 = vmatprep.subr.bf16.mxu0 0
        %730 = vmatpush2.bf16.msra.mxu0 0
        %731 = vmatprep.subr.bf16.mxu0 0
        %732 = vmatpush2.bf16.msra.mxu0 0
        %733 = vmatprep.subr.bf16.mxu0 0
        %734 = vmatpush2.bf16.msra.mxu0 0
        %735 = vmatprep.mubr.bf16.mxu0 0
        %736 = vmatmul.mubr.bf16.gmra.mxu0 %v701
        %v737 = vpop.f32.mrf.mxu0
        %v738 = vadd.f32 0.0, %v737
        %v739 = vpop.f32.mrf.mxu0
        %v740 = vpop.f32.mrf.mxu0
        %v741 = vadd.f32 0.0, %v740
        %v742 = vpop.f32.mrf.mxu0
        %743 = vdwg.mxu0
        %v745 = vunpack.c.l.b16 %v652
        %v746 = vpack.c.b16 %v745, %v745
        %vm747 = vcmask 1044480
        %v748 = vrot.slane %v669, 3
        %v749 = vrot.slane %v746, 3
        %v750 = vsel %vm747, %v748, %v749
        %v755 = vunpack.c.l.b16 %v653
        %v756 = vunpack.c.l.b16 %v654
        %v757 = vunpack.c.l.b16 %v655
        %v758 = vunpack.c.l.b16 %v656
        %v759 = vpack.c.b16 %v756, %v755
        %v760 = vpack.c.b16 %v758, %v757
        %v764 = vsel %vm334, %v750, 0
        %766 = vmatprep.subr.bf16.mxu0 0
        %767 = vmatpush1.bf16.msra.mxu0 0
        %768 = vmatprep.subr.bf16.mxu0 0
        %769 = vmatpush1.bf16.msra.mxu0 0
        %770 = vmatprep.subr.bf16.mxu0 0
        %771 = vmatpush1.bf16.msra.mxu0 0
        %772 = vmatprep.subr.bf16.mxu0 0
        %773 = vmatpush1.bf16.msra.mxu0 0
        %774 = vmatprep.subr.bf16.mxu0 0
        %775 = vmatpush1.bf16.msra.mxu0 0
        %776 = vmatprep.subr.bf16.mxu0 0
        %777 = vmatpush1.bf16.msra.mxu0 0
        %778 = vmatprep.subr.bf16.mxu0 0
        %779 = vmatpush1.bf16.msra.mxu0 %v760
        %780 = vmatprep.subr.bf16.mxu0 0
        %781 = vmatpush1.bf16.msra.mxu0 %v759
        %782 = vmatprep.subr.bf16.mxu0 0
        %783 = vmatpush2.bf16.msra.mxu0 0
        %784 = vmatprep.subr.bf16.mxu0 0
        %785 = vmatpush2.bf16.msra.mxu0 0
        %786 = vmatprep.subr.bf16.mxu0 0
        %787 = vmatpush2.bf16.msra.mxu0 0
        %788 = vmatprep.subr.bf16.mxu0 0
        %789 = vmatpush2.bf16.msra.mxu0 0
        %790 = vmatprep.subr.bf16.mxu0 0
        %791 = vmatpush2.bf16.msra.mxu0 0
        %792 = vmatprep.subr.bf16.mxu0 0
        %793 = vmatpush2.bf16.msra.mxu0 0
        %794 = vmatprep.subr.bf16.mxu0 0
        %795 = vmatpush2.bf16.msra.mxu0 0
        %796 = vmatprep.subr.bf16.mxu0 0
        %797 = vmatpush2.bf16.msra.mxu0 0
        %798 = vmatprep.mubr.bf16.mxu0 0
        %799 = vmatmul.mubr.bf16.gmra.mxu0 %v764
        %v800 = vpop.f32.mrf.mxu0
        %v801 = vadd.f32 %v738, %v800
        %v802 = vpop.f32.mrf.mxu0
        %v803 = vpop.f32.mrf.mxu0
        %v804 = vadd.f32 %v741, %v803
        %v805 = vpop.f32.mrf.mxu0
        %806 = vdwg.mxu0
        %s807 = scalar_lea.vmem %s5, 32
        %v808 = vld [vmem:[%s807] sm:$0xf]
        %v809 = vld [vmem:[%s807 + $0x4] sm:$0xf]
        %v810 = vld [vmem:[%s807 + $0x8] sm:$0xf]
        %v811 = vld [vmem:[%s807 + $0xc] sm:$0xf]
        %v812 = vpack.c.b16 %v668, %v667
        %v817 = vunpack.c.l.b16 %v808
        %v818 = vunpack.c.l.b16 %v809
        %v819 = vunpack.c.l.b16 %v810
        %v820 = vunpack.c.l.b16 %v811
        %v821 = vpack.c.b16 %v818, %v817
        %v822 = vpack.c.b16 %v820, %v819
        %v826 = vsel %vm334, %v812, 0
        %828 = vmatprep.subr.bf16.mxu0 0
        %829 = vmatpush1.bf16.msra.mxu0 0
        %830 = vmatprep.subr.bf16.mxu0 0
        %831 = vmatpush1.bf16.msra.mxu0 0
        %832 = vmatprep.subr.bf16.mxu0 0
        %833 = vmatpush1.bf16.msra.mxu0 0
        %834 = vmatprep.subr.bf16.mxu0 0
        %835 = vmatpush1.bf16.msra.mxu0 0
        %836 = vmatprep.subr.bf16.mxu0 0
        %837 = vmatpush1.bf16.msra.mxu0 0
        %838 = vmatprep.subr.bf16.mxu0 0
        %839 = vmatpush1.bf16.msra.mxu0 0
        %840 = vmatprep.subr.bf16.mxu0 0
        %841 = vmatpush1.bf16.msra.mxu0 %v822
        %842 = vmatprep.subr.bf16.mxu0 0
        %843 = vmatpush1.bf16.msra.mxu0 %v821
        %844 = vmatprep.subr.bf16.mxu0 0
        %845 = vmatpush2.bf16.msra.mxu0 0
        %846 = vmatprep.subr.bf16.mxu0 0
        %847 = vmatpush2.bf16.msra.mxu0 0
        %848 = vmatprep.subr.bf16.mxu0 0
        %849 = vmatpush2.bf16.msra.mxu0 0
        %850 = vmatprep.subr.bf16.mxu0 0
        %851 = vmatpush2.bf16.msra.mxu0 0
        %852 = vmatprep.subr.bf16.mxu0 0
        %853 = vmatpush2.bf16.msra.mxu0 0
        %854 = vmatprep.subr.bf16.mxu0 0
        %855 = vmatpush2.bf16.msra.mxu0 0
        %856 = vmatprep.subr.bf16.mxu0 0
        %857 = vmatpush2.bf16.msra.mxu0 0
        %858 = vmatprep.subr.bf16.mxu0 0
        %859 = vmatpush2.bf16.msra.mxu0 0
        %860 = vmatprep.mubr.bf16.mxu0 0
        %861 = vmatmul.mubr.bf16.gmra.mxu0 %v826
        %v862 = vpop.f32.mrf.mxu0
        %v863 = vadd.f32 0.0, %v862
        %v864 = vpop.f32.mrf.mxu0
        %v865 = vpop.f32.mrf.mxu0
        %v866 = vadd.f32 0.0, %v865
        %v867 = vpop.f32.mrf.mxu0
        %868 = vdwg.mxu0
        %v869 = vadd.f32 %v801, %v863
        %v870 = vadd.f32 %v804, %v866
        %v871 = vld [vmem:[#allocation2 + $0x4] sm:$0xf]
        %v872 = vld [vmem:[#allocation2 + $0x8] sm:$0xf]
        %v873 = vld [vmem:[#allocation2 + $0xc] sm:$0x1]
        %s874 = scalar_lea.vmem %s5, 48
        %v875 = vld [vmem:[%s874] sm:$0xf]
        %v876 = vld [vmem:[%s874 + $0x4] sm:$0xf]
        %v877 = vld [vmem:[%s874 + $0x8] sm:$0xf]
        %v878 = vld [vmem:[%s874 + $0xc] sm:$0xf]
        %v882 = vunpack.c.l.b16 %v871
        %v883 = vunpack.c.l.b16 %v872
        %v884 = vunpack.c.l.b16 %v873
        %v885 = vpack.c.b16 %v883, %v882
        %v886 = vpack.c.b16 %v884, %v884
        %v888 = vshrl.u32 %v885, 16
        %v890 = vshll.u32 %v885, 16
        %v892 = vrot.slane %v890, 1
        %v893 = vor.u32 %v888, %v892
        %v895 = vshll.u32 %v886, 16
        %v897 = vrot.slane %v895, 1
        %v898 = vsel %vm560, %v893, %v897
        %v903 = vunpack.c.l.b16 %v875
        %v904 = vunpack.c.l.b16 %v876
        %v905 = vunpack.c.l.b16 %v877
        %v906 = vunpack.c.l.b16 %v878
        %v907 = vpack.c.b16 %v904, %v903
        %v908 = vpack.c.b16 %v906, %v905
        %v912 = vsel %vm334, %v898, 0
        %914 = vmatprep.subr.bf16.mxu0 0
        %915 = vmatpush1.bf16.msra.mxu0 0
        %916 = vmatprep.subr.bf16.mxu0 0
        %917 = vmatpush1.bf16.msra.mxu0 0
        %918 = vmatprep.subr.bf16.mxu0 0
        %919 = vmatpush1.bf16.msra.mxu0 0
        %920 = vmatprep.subr.bf16.mxu0 0
        %921 = vmatpush1.bf16.msra.mxu0 0
        %922 = vmatprep.subr.bf16.mxu0 0
        %923 = vmatpush1.bf16.msra.mxu0 0
        %924 = vmatprep.subr.bf16.mxu0 0
        %925 = vmatpush1.bf16.msra.mxu0 0
        %926 = vmatprep.subr.bf16.mxu0 0
        %927 = vmatpush1.bf16.msra.mxu0 %v908
        %928 = vmatprep.subr.bf16.mxu0 0
        %929 = vmatpush1.bf16.msra.mxu0 %v907
        %930 = vmatprep.subr.bf16.mxu0 0
        %931 = vmatpush2.bf16.msra.mxu0 0
        %932 = vmatprep.subr.bf16.mxu0 0
        %933 = vmatpush2.bf16.msra.mxu0 0
        %934 = vmatprep.subr.bf16.mxu0 0
        %935 = vmatpush2.bf16.msra.mxu0 0
        %936 = vmatprep.subr.bf16.mxu0 0
        %937 = vmatpush2.bf16.msra.mxu0 0
        %938 = vmatprep.subr.bf16.mxu0 0
        %939 = vmatpush2.bf16.msra.mxu0 0
        %940 = vmatprep.subr.bf16.mxu0 0
        %941 = vmatpush2.bf16.msra.mxu0 0
        %942 = vmatprep.subr.bf16.mxu0 0
        %943 = vmatpush2.bf16.msra.mxu0 0
        %944 = vmatprep.subr.bf16.mxu0 0
        %945 = vmatpush2.bf16.msra.mxu0 0
        %946 = vmatprep.mubr.bf16.mxu0 0
        %947 = vmatmul.mubr.bf16.gmra.mxu0 %v912
        %v948 = vpop.f32.mrf.mxu0
        %v949 = vadd.f32 0.0, %v948
        %v950 = vpop.f32.mrf.mxu0
        %v951 = vpop.f32.mrf.mxu0
        %v952 = vadd.f32 0.0, %v951
        %v953 = vpop.f32.mrf.mxu0
        %954 = vdwg.mxu0
        %v955 = vadd.f32 %v869, %v949
        %v956 = vadd.f32 %v870, %v952
        %v957 = vld [vmem:[#allocation2 + $0x4] sm:$0xe]
        %s958 = scalar_lea.vmem %s5, 64
        %v959 = vld [vmem:[%s958] sm:$0xf]
        %v960 = vld [vmem:[%s958 + $0x4] sm:$0xf]
        %v961 = vld [vmem:[%s958 + $0x8] sm:$0xf]
        %v962 = vld [vmem:[%s958 + $0xc] sm:$0xf]
        %v964 = vunpack.c.l.b16 %v957
        %v965 = vpack.c.b16 %v883, %v964
        %vm966 = vcmask 1046528
        %v967 = vrot.slane %v965, 1
        %v968 = vrot.slane %v886, 1
        %v969 = vsel %vm966, %v967, %v968
        %v974 = vunpack.c.l.b16 %v959
        %v975 = vunpack.c.l.b16 %v960
        %v976 = vunpack.c.l.b16 %v961
        %v977 = vunpack.c.l.b16 %v962
        %v978 = vpack.c.b16 %v975, %v974
        %v979 = vpack.c.b16 %v977, %v976
        %v983 = vsel %vm334, %v969, 0
        %985 = vmatprep.subr.bf16.mxu0 0
        %986 = vmatpush1.bf16.msra.mxu0 0
        %987 = vmatprep.subr.bf16.mxu0 0
        %988 = vmatpush1.bf16.msra.mxu0 0
        %989 = vmatprep.subr.bf16.mxu0 0
        %990 = vmatpush1.bf16.msra.mxu0 0
        %991 = vmatprep.subr.bf16.mxu0 0
        %992 = vmatpush1.bf16.msra.mxu0 0
        %993 = vmatprep.subr.bf16.mxu0 0
        %994 = vmatpush1.bf16.msra.mxu0 0
        %995 = vmatprep.subr.bf16.mxu0 0
        %996 = vmatpush1.bf16.msra.mxu0 0
        %997 = vmatprep.subr.bf16.mxu0 0
        %998 = vmatpush1.bf16.msra.mxu0 %v979
        %999 = vmatprep.subr.bf16.mxu0 0
        %1000 = vmatpush1.bf16.msra.mxu0 %v978
        %1001 = vmatprep.subr.bf16.mxu0 0
        %1002 = vmatpush2.bf16.msra.mxu0 0
        %1003 = vmatprep.subr.bf16.mxu0 0
        %1004 = vmatpush2.bf16.msra.mxu0 0
        %1005 = vmatprep.subr.bf16.mxu0 0
        %1006 = vmatpush2.bf16.msra.mxu0 0
        %1007 = vmatprep.subr.bf16.mxu0 0
        %1008 = vmatpush2.bf16.msra.mxu0 0
        %1009 = vmatprep.subr.bf16.mxu0 0
        %1010 = vmatpush2.bf16.msra.mxu0 0
        %1011 = vmatprep.subr.bf16.mxu0 0
        %1012 = vmatpush2.bf16.msra.mxu0 0
        %1013 = vmatprep.subr.bf16.mxu0 0
        %1014 = vmatpush2.bf16.msra.mxu0 0
        %1015 = vmatprep.subr.bf16.mxu0 0
        %1016 = vmatpush2.bf16.msra.mxu0 0
        %1017 = vmatprep.mubr.bf16.mxu0 0
        %1018 = vmatmul.mubr.bf16.gmra.mxu0 %v983
        %v1019 = vpop.f32.mrf.mxu0
        %v1020 = vadd.f32 0.0, %v1019
        %v1021 = vpop.f32.mrf.mxu0
        %v1022 = vpop.f32.mrf.mxu0
        %v1023 = vadd.f32 0.0, %v1022
        %v1024 = vpop.f32.mrf.mxu0
        %1025 = vdwg.mxu0
        %v1026 = vadd.f32 %v955, %v1020
        %v1027 = vadd.f32 %v956, %v1023
        %v1028 = vld [vmem:[%s6] sm:$0x1]
        %v1030 = vlaneseq
        %v1031 = vshrl.u32 %v1030, 7
        %v1032 = vsub.s32 0, %v1031
        %v1033 = vrot.slane %v1028, %v1032
        %v1035 = vadd.f32 %v1026, %v1033
        %v1036 = vadd.f32 %v1027, %v1033
        %v1037 = vpack.c.bf16 %v1036, %v1035
        %v1039 = vunpack.c.l.b16 %v1037
        %v1040 = vunpack.c.h.b16 %v1037
        %v1041 = vpack.c.b16 %v1039, %v1039
        %v1042 = vpack.c.b16 %v1040, %v1040
        %1045 = vst.msk [vmem:[#allocation2 + $0x4] sm:$0xf] %vm380, %v1041
        %1046 = vst.msk [vmem:[#allocation2 + $0x8] sm:$0xf] %vm380, %v1042
        %v1047 = vld [vmem:[#allocation2] sm:$0xc]
        %v1048 = vld [vmem:[#allocation2 + $0x4] sm:$0xf]
        %v1049 = vld [vmem:[#allocation2 + $0x8] sm:$0x7]
        %v1050 = vld [vmem:[%s7] sm:$0xf]
        %v1051 = vld [vmem:[%s7 + $0x4] sm:$0xf]
        %v1052 = vld [vmem:[%s7 + $0x8] sm:$0xf]
        %v1053 = vld [vmem:[%s7 + $0xc] sm:$0xf]
        %v1054 = vld [vmem:[#allocation2] sm:$0x8]
        %s1055 = scalar_lea.vmem %s7, 16
        %v1056 = vld [vmem:[%s1055] sm:$0xf]
        %v1057 = vld [vmem:[%s1055 + $0x4] sm:$0xf]
        %v1058 = vld [vmem:[%s1055 + $0x8] sm:$0xf]
        %v1059 = vld [vmem:[%s1055 + $0xc] sm:$0xf]
        %v1063 = vunpack.c.l.b16 %v1054
        %v1064 = vunpack.c.l.b16 %v1048
        %v1065 = vunpack.c.l.b16 %v1049
        %v1066 = vpack.c.b16 %v1064, %v1063
        %v1067 = vpack.c.b16 %v1065, %v1065
        %v1068 = vrot.slane %v1066, 3
        %v1069 = vrot.slane %v1067, 3
        %v1070 = vsel %vm747, %v1068, %v1069
        %v1075 = vunpack.c.l.b16 %v1056
        %v1076 = vunpack.c.l.b16 %v1057
        %v1077 = vunpack.c.l.b16 %v1058
        %v1078 = vunpack.c.l.b16 %v1059
        %v1079 = vpack.c.b16 %v1076, %v1075
        %v1080 = vpack.c.b16 %v1078, %v1077
        %v1084 = vsel %vm334, %v1070, 0
        %1086 = vmatprep.subr.bf16.mxu0 0
        %1087 = vmatpush1.bf16.msra.mxu0 0
        %1088 = vmatprep.subr.bf16.mxu0 0
        %1089 = vmatpush1.bf16.msra.mxu0 0
        %1090 = vmatprep.subr.bf16.mxu0 0
        %1091 = vmatpush1.bf16.msra.mxu0 0
        %1092 = vmatprep.subr.bf16.mxu0 0
        %1093 = vmatpush1.bf16.msra.mxu0 0
        %1094 = vmatprep.subr.bf16.mxu0 0
        %1095 = vmatpush1.bf16.msra.mxu0 0
        %1096 = vmatprep.subr.bf16.mxu0 0
        %1097 = vmatpush1.bf16.msra.mxu0 0
        %1098 = vmatprep.subr.bf16.mxu0 0
        %1099 = vmatpush1.bf16.msra.mxu0 %v1080
        %1100 = vmatprep.subr.bf16.mxu0 0
        %1101 = vmatpush1.bf16.msra.mxu0 %v1079
        %1102 = vmatprep.subr.bf16.mxu0 0
        %1103 = vmatpush2.bf16.msra.mxu0 0
        %1104 = vmatprep.subr.bf16.mxu0 0
        %1105 = vmatpush2.bf16.msra.mxu0 0
        %1106 = vmatprep.subr.bf16.mxu0 0
        %1107 = vmatpush2.bf16.msra.mxu0 0
        %1108 = vmatprep.subr.bf16.mxu0 0
        %1109 = vmatpush2.bf16.msra.mxu0 0
        %1110 = vmatprep.subr.bf16.mxu0 0
        %1111 = vmatpush2.bf16.msra.mxu0 0
        %1112 = vmatprep.subr.bf16.mxu0 0
        %1113 = vmatpush2.bf16.msra.mxu0 0
        %1114 = vmatprep.subr.bf16.mxu0 0
        %1115 = vmatpush2.bf16.msra.mxu0 0
        %1116 = vmatprep.subr.bf16.mxu0 0
        %1117 = vmatpush2.bf16.msra.mxu0 0
        %1118 = vmatprep.mubr.bf16.mxu0 0
        %1119 = vmatmul.mubr.bf16.gmra.mxu0 %v1084
        %v1120 = vpop.f32.mrf.mxu0
        %v1121 = vadd.f32 0.0, %v1120
        %v1122 = vpop.f32.mrf.mxu0
        %v1123 = vpop.f32.mrf.mxu0
        %v1124 = vadd.f32 0.0, %v1123
        %v1125 = vpop.f32.mrf.mxu0
        %1126 = vdwg.mxu0
        %v1128 = vunpack.c.l.b16 %v1047
        %v1129 = vpack.c.b16 %v1064, %v1128
        %vm1130 = vsmask.f32 5376
        %v1132 = vshrl.u32 %v1129, 16
        %v1134 = vrot.slane %v1132, 2
        %v1135 = vshll.u32 %v1129, 16
        %v1137 = vrot.slane %v1135, 3
        %v1138 = vor.u32 %v1134, %v1137
        %v1140 = vshrl.u32 %v1067, 16
        %v1142 = vrot.slane %v1140, 2
        %v1143 = vshll.u32 %v1067, 16
        %v1145 = vrot.slane %v1143, 3
        %v1146 = vor.u32 %v1142, %v1145
        %v1147 = vsel %vm1130, %v1138, %v1146
        %v1152 = vunpack.c.l.b16 %v1050
        %v1153 = vunpack.c.l.b16 %v1051
        %v1154 = vunpack.c.l.b16 %v1052
        %v1155 = vunpack.c.l.b16 %v1053
        %v1156 = vpack.c.b16 %v1153, %v1152
        %v1157 = vpack.c.b16 %v1155, %v1154
        %v1161 = vsel %vm334, %v1147, 0
        %1163 = vmatprep.subr.bf16.mxu0 0
        %1164 = vmatpush1.bf16.msra.mxu0 0
        %1165 = vmatprep.subr.bf16.mxu0 0
        %1166 = vmatpush1.bf16.msra.mxu0 0
        %1167 = vmatprep.subr.bf16.mxu0 0
        %1168 = vmatpush1.bf16.msra.mxu0 0
        %1169 = vmatprep.subr.bf16.mxu0 0
        %1170 = vmatpush1.bf16.msra.mxu0 0
        %1171 = vmatprep.subr.bf16.mxu0 0
        %1172 = vmatpush1.bf16.msra.mxu0 0
        %1173 = vmatprep.subr.bf16.mxu0 0
        %1174 = vmatpush1.bf16.msra.mxu0 0
        %1175 = vmatprep.subr.bf16.mxu0 0
        %1176 = vmatpush1.bf16.msra.mxu0 %v1157
        %1177 = vmatprep.subr.bf16.mxu0 0
        %1178 = vmatpush1.bf16.msra.mxu0 %v1156
        %1179 = vmatprep.subr.bf16.mxu0 0
        %1180 = vmatpush2.bf16.msra.mxu0 0
        %1181 = vmatprep.subr.bf16.mxu0 0
        %1182 = vmatpush2.bf16.msra.mxu0 0
        %1183 = vmatprep.subr.bf16.mxu0 0
        %1184 = vmatpush2.bf16.msra.mxu0 0
        %1185 = vmatprep.subr.bf16.mxu0 0
        %1186 = vmatpush2.bf16.msra.mxu0 0
        %1187 = vmatprep.subr.bf16.mxu0 0
        %1188 = vmatpush2.bf16.msra.mxu0 0
        %1189 = vmatprep.subr.bf16.mxu0 0
        %1190 = vmatpush2.bf16.msra.mxu0 0
        %1191 = vmatprep.subr.bf16.mxu0 0
        %1192 = vmatpush2.bf16.msra.mxu0 0
        %1193 = vmatprep.subr.bf16.mxu0 0
        %1194 = vmatpush2.bf16.msra.mxu0 0
        %1195 = vmatprep.mubr.bf16.mxu0 0
        %1196 = vmatmul.mubr.bf16.gmra.mxu0 %v1161
        %v1197 = vpop.f32.mrf.mxu0
        %v1198 = vadd.f32 %v1121, %v1197
        %v1199 = vpop.f32.mrf.mxu0
        %v1200 = vpop.f32.mrf.mxu0
        %v1201 = vadd.f32 %v1124, %v1200
        %v1202 = vpop.f32.mrf.mxu0
        %1203 = vdwg.mxu0
        %v1204 = vld [vmem:[#allocation2 + $0x8] sm:$0xf]
        %s1205 = scalar_lea.vmem %s7, 32
        %v1206 = vld [vmem:[%s1205] sm:$0xf]
        %v1207 = vld [vmem:[%s1205 + $0x4] sm:$0xf]
        %v1208 = vld [vmem:[%s1205 + $0x8] sm:$0xf]
        %v1209 = vld [vmem:[%s1205 + $0xc] sm:$0xf]
        %v1211 = vunpack.c.l.b16 %v1204
        %v1212 = vpack.c.b16 %v1211, %v1211
        %v1214 = vshrl.u32 %v1066, 16
        %v1216 = vrot.slane %v1214, 3
        %v1217 = vshll.u32 %v1066, 16
        %v1219 = vrot.slane %v1217, 4
        %v1220 = vor.u32 %v1216, %v1219
        %v1222 = vshrl.u32 %v1212, 16
        %v1224 = vrot.slane %v1222, 3
        %v1225 = vshll.u32 %v1212, 16
        %v1227 = vrot.slane %v1225, 4
        %v1228 = vor.u32 %v1224, %v1227
        %v1229 = vsel %vm470, %v1220, %v1228
        %v1234 = vunpack.c.l.b16 %v1206
        %v1235 = vunpack.c.l.b16 %v1207
        %v1236 = vunpack.c.l.b16 %v1208
        %v1237 = vunpack.c.l.b16 %v1209
        %v1238 = vpack.c.b16 %v1235, %v1234
        %v1239 = vpack.c.b16 %v1237, %v1236
        %v1243 = vsel %vm334, %v1229, 0
        %1245 = vmatprep.subr.bf16.mxu0 0
        %1246 = vmatpush1.bf16.msra.mxu0 0
        %1247 = vmatprep.subr.bf16.mxu0 0
        %1248 = vmatpush1.bf16.msra.mxu0 0
        %1249 = vmatprep.subr.bf16.mxu0 0
        %1250 = vmatpush1.bf16.msra.mxu0 0
        %1251 = vmatprep.subr.bf16.mxu0 0
        %1252 = vmatpush1.bf16.msra.mxu0 0
        %1253 = vmatprep.subr.bf16.mxu0 0
        %1254 = vmatpush1.bf16.msra.mxu0 0
        %1255 = vmatprep.subr.bf16.mxu0 0
        %1256 = vmatpush1.bf16.msra.mxu0 0
        %1257 = vmatprep.subr.bf16.mxu0 0
        %1258 = vmatpush1.bf16.msra.mxu0 %v1239
        %1259 = vmatprep.subr.bf16.mxu0 0
        %1260 = vmatpush1.bf16.msra.mxu0 %v1238
        %1261 = vmatprep.subr.bf16.mxu0 0
        %1262 = vmatpush2.bf16.msra.mxu0 0
        %1263 = vmatprep.subr.bf16.mxu0 0
        %1264 = vmatpush2.bf16.msra.mxu0 0
        %1265 = vmatprep.subr.bf16.mxu0 0
        %1266 = vmatpush2.bf16.msra.mxu0 0
        %1267 = vmatprep.subr.bf16.mxu0 0
        %1268 = vmatpush2.bf16.msra.mxu0 0
        %1269 = vmatprep.subr.bf16.mxu0 0
        %1270 = vmatpush2.bf16.msra.mxu0 0
        %1271 = vmatprep.subr.bf16.mxu0 0
        %1272 = vmatpush2.bf16.msra.mxu0 0
        %1273 = vmatprep.subr.bf16.mxu0 0
        %1274 = vmatpush2.bf16.msra.mxu0 0
        %1275 = vmatprep.subr.bf16.mxu0 0
        %1276 = vmatpush2.bf16.msra.mxu0 0
        %1277 = vmatprep.mubr.bf16.mxu0 0
        %1278 = vmatmul.mubr.bf16.gmra.mxu0 %v1243
        %v1279 = vpop.f32.mrf.mxu0
        %v1280 = vadd.f32 0.0, %v1279
        %v1281 = vpop.f32.mrf.mxu0
        %v1282 = vpop.f32.mrf.mxu0
        %v1283 = vadd.f32 0.0, %v1282
        %v1284 = vpop.f32.mrf.mxu0
        %1285 = vdwg.mxu0
        %v1286 = vadd.f32 %v1198, %v1280
        %v1287 = vadd.f32 %v1201, %v1283
        %s1288 = scalar_lea.vmem %s7, 48
        %v1289 = vld [vmem:[%s1288] sm:$0xf]
        %v1290 = vld [vmem:[%s1288 + $0x4] sm:$0xf]
        %v1291 = vld [vmem:[%s1288 + $0x8] sm:$0xf]
        %v1292 = vld [vmem:[%s1288 + $0xc] sm:$0xf]
        %v1293 = vpack.c.b16 %v1211, %v1064
        %v1298 = vunpack.c.l.b16 %v1289
        %v1299 = vunpack.c.l.b16 %v1290
        %v1300 = vunpack.c.l.b16 %v1291
        %v1301 = vunpack.c.l.b16 %v1292
        %v1302 = vpack.c.b16 %v1299, %v1298
        %v1303 = vpack.c.b16 %v1301, %v1300
        %v1307 = vsel %vm334, %v1293, 0
        %1309 = vmatprep.subr.bf16.mxu0 0
        %1310 = vmatpush1.bf16.msra.mxu0 0
        %1311 = vmatprep.subr.bf16.mxu0 0
        %1312 = vmatpush1.bf16.msra.mxu0 0
        %1313 = vmatprep.subr.bf16.mxu0 0
        %1314 = vmatpush1.bf16.msra.mxu0 0
        %1315 = vmatprep.subr.bf16.mxu0 0
        %1316 = vmatpush1.bf16.msra.mxu0 0
        %1317 = vmatprep.subr.bf16.mxu0 0
        %1318 = vmatpush1.bf16.msra.mxu0 0
        %1319 = vmatprep.subr.bf16.mxu0 0
        %1320 = vmatpush1.bf16.msra.mxu0 0
        %1321 = vmatprep.subr.bf16.mxu0 0
        %1322 = vmatpush1.bf16.msra.mxu0 %v1303
        %1323 = vmatprep.subr.bf16.mxu0 0
        %1324 = vmatpush1.bf16.msra.mxu0 %v1302
        %1325 = vmatprep.subr.bf16.mxu0 0
        %1326 = vmatpush2.bf16.msra.mxu0 0
        %1327 = vmatprep.subr.bf16.mxu0 0
        %1328 = vmatpush2.bf16.msra.mxu0 0
        %1329 = vmatprep.subr.bf16.mxu0 0
        %1330 = vmatpush2.bf16.msra.mxu0 0
        %1331 = vmatprep.subr.bf16.mxu0 0
        %1332 = vmatpush2.bf16.msra.mxu0 0
        %1333 = vmatprep.subr.bf16.mxu0 0
        %1334 = vmatpush2.bf16.msra.mxu0 0
        %1335 = vmatprep.subr.bf16.mxu0 0
        %1336 = vmatpush2.bf16.msra.mxu0 0
        %1337 = vmatprep.subr.bf16.mxu0 0
        %1338 = vmatpush2.bf16.msra.mxu0 0
        %1339 = vmatprep.subr.bf16.mxu0 0
        %1340 = vmatpush2.bf16.msra.mxu0 0
        %1341 = vmatprep.mubr.bf16.mxu0 0
        %1342 = vmatmul.mubr.bf16.gmra.mxu0 %v1307
        %v1343 = vpop.f32.mrf.mxu0
        %v1344 = vadd.f32 0.0, %v1343
        %v1345 = vpop.f32.mrf.mxu0
        %v1346 = vpop.f32.mrf.mxu0
        %v1347 = vadd.f32 0.0, %v1346
        %v1348 = vpop.f32.mrf.mxu0
        %1349 = vdwg.mxu0
        %v1350 = vadd.f32 %v1286, %v1344
        %v1351 = vadd.f32 %v1287, %v1347
        %v1352 = vld [vmem:[#allocation2 + $0x4] sm:$0xf]
        %v1353 = vld [vmem:[#allocation2 + $0x8] sm:$0xf]
        %v1354 = vld [vmem:[#allocation2 + $0xc] sm:$0x1]
        %s1355 = scalar_lea.vmem %s7, 64
        %v1356 = vld [vmem:[%s1355] sm:$0xf]
        %v1357 = vld [vmem:[%s1355 + $0x4] sm:$0xf]
        %v1358 = vld [vmem:[%s1355 + $0x8] sm:$0xf]
        %v1359 = vld [vmem:[%s1355 + $0xc] sm:$0xf]
        %v1363 = vunpack.c.l.b16 %v1352
        %v1364 = vunpack.c.l.b16 %v1353
        %v1365 = vunpack.c.l.b16 %v1354
        %v1366 = vpack.c.b16 %v1364, %v1363
        %v1367 = vpack.c.b16 %v1365, %v1365
        %v1369 = vshrl.u32 %v1366, 16
        %v1371 = vshll.u32 %v1366, 16
        %v1373 = vrot.slane %v1371, 1
        %v1374 = vor.u32 %v1369, %v1373
        %v1376 = vshll.u32 %v1367, 16
        %v1378 = vrot.slane %v1376, 1
        %v1379 = vsel %vm560, %v1374, %v1378
        %v1384 = vunpack.c.l.b16 %v1356
        %v1385 = vunpack.c.l.b16 %v1357
        %v1386 = vunpack.c.l.b16 %v1358
        %v1387 = vunpack.c.l.b16 %v1359
        %v1388 = vpack.c.b16 %v1385, %v1384
        %v1389 = vpack.c.b16 %v1387, %v1386
        %v1393 = vsel %vm334, %v1379, 0
        %1395 = vmatprep.subr.bf16.mxu0 0
        %1396 = vmatpush1.bf16.msra.mxu0 0
        %1397 = vmatprep.subr.bf16.mxu0 0
        %1398 = vmatpush1.bf16.msra.mxu0 0
        %1399 = vmatprep.subr.bf16.mxu0 0
        %1400 = vmatpush1.bf16.msra.mxu0 0
        %1401 = vmatprep.subr.bf16.mxu0 0
        %1402 = vmatpush1.bf16.msra.mxu0 0
        %1403 = vmatprep.subr.bf16.mxu0 0
        %1404 = vmatpush1.bf16.msra.mxu0 0
        %1405 = vmatprep.subr.bf16.mxu0 0
        %1406 = vmatpush1.bf16.msra.mxu0 0
        %1407 = vmatprep.subr.bf16.mxu0 0
        %1408 = vmatpush1.bf16.msra.mxu0 %v1389
        %1409 = vmatprep.subr.bf16.mxu0 0
        %1410 = vmatpush1.bf16.msra.mxu0 %v1388
        %1411 = vmatprep.subr.bf16.mxu0 0
        %1412 = vmatpush2.bf16.msra.mxu0 0
        %1413 = vmatprep.subr.bf16.mxu0 0
        %1414 = vmatpush2.bf16.msra.mxu0 0
        %1415 = vmatprep.subr.bf16.mxu0 0
        %1416 = vmatpush2.bf16.msra.mxu0 0
        %1417 = vmatprep.subr.bf16.mxu0 0
        %1418 = vmatpush2.bf16.msra.mxu0 0
        %1419 = vmatprep.subr.bf16.mxu0 0
        %1420 = vmatpush2.bf16.msra.mxu0 0
        %1421 = vmatprep.subr.bf16.mxu0 0
        %1422 = vmatpush2.bf16.msra.mxu0 0
        %1423 = vmatprep.subr.bf16.mxu0 0
        %1424 = vmatpush2.bf16.msra.mxu0 0
        %1425 = vmatprep.subr.bf16.mxu0 0
        %1426 = vmatpush2.bf16.msra.mxu0 0
        %1427 = vmatprep.mubr.bf16.mxu0 0
        %1428 = vmatmul.mubr.bf16.gmra.mxu0 %v1393
        %v1429 = vpop.f32.mrf.mxu0
        %v1430 = vadd.f32 0.0, %v1429
        %v1431 = vpop.f32.mrf.mxu0
        %v1432 = vpop.f32.mrf.mxu0
        %v1433 = vadd.f32 0.0, %v1432
        %v1434 = vpop.f32.mrf.mxu0
        %1435 = vdwg.mxu0
        %v1436 = vadd.f32 %v1350, %v1430
        %v1437 = vadd.f32 %v1351, %v1433
        %v1438 = vld [vmem:[#allocation2 + $0x4] sm:$0xe]
        %s1439 = scalar_lea.vmem %s7, 80
        %v1440 = vld [vmem:[%s1439] sm:$0xf]
        %v1441 = vld [vmem:[%s1439 + $0x4] sm:$0xf]
        %v1442 = vld [vmem:[%s1439 + $0x8] sm:$0xf]
        %v1443 = vld [vmem:[%s1439 + $0xc] sm:$0xf]
        %v1445 = vunpack.c.l.b16 %v1438
        %v1446 = vpack.c.b16 %v1364, %v1445
        %v1447 = vrot.slane %v1446, 1
        %v1448 = vrot.slane %v1367, 1
        %v1449 = vsel %vm966, %v1447, %v1448
        %v1454 = vunpack.c.l.b16 %v1440
        %v1455 = vunpack.c.l.b16 %v1441
        %v1456 = vunpack.c.l.b16 %v1442
        %v1457 = vunpack.c.l.b16 %v1443
        %v1458 = vpack.c.b16 %v1455, %v1454
        %v1459 = vpack.c.b16 %v1457, %v1456
        %v1463 = vsel %vm334, %v1449, 0
        %1465 = vmatprep.subr.bf16.mxu0 0
        %1466 = vmatpush1.bf16.msra.mxu0 0
        %1467 = vmatprep.subr.bf16.mxu0 0
        %1468 = vmatpush1.bf16.msra.mxu0 0
        %1469 = vmatprep.subr.bf16.mxu0 0
        %1470 = vmatpush1.bf16.msra.mxu0 0
        %1471 = vmatprep.subr.bf16.mxu0 0
        %1472 = vmatpush1.bf16.msra.mxu0 0
        %1473 = vmatprep.subr.bf16.mxu0 0
        %1474 = vmatpush1.bf16.msra.mxu0 0
        %1475 = vmatprep.subr.bf16.mxu0 0
        %1476 = vmatpush1.bf16.msra.mxu0 0
        %1477 = vmatprep.subr.bf16.mxu0 0
        %1478 = vmatpush1.bf16.msra.mxu0 %v1459
        %1479 = vmatprep.subr.bf16.mxu0 0
        %1480 = vmatpush1.bf16.msra.mxu0 %v1458
        %1481 = vmatprep.subr.bf16.mxu0 0
        %1482 = vmatpush2.bf16.msra.mxu0 0
        %1483 = vmatprep.subr.bf16.mxu0 0
        %1484 = vmatpush2.bf16.msra.mxu0 0
        %1485 = vmatprep.subr.bf16.mxu0 0
        %1486 = vmatpush2.bf16.msra.mxu0 0
        %1487 = vmatprep.subr.bf16.mxu0 0
        %1488 = vmatpush2.bf16.msra.mxu0 0
        %1489 = vmatprep.subr.bf16.mxu0 0
        %1490 = vmatpush2.bf16.msra.mxu0 0
        %1491 = vmatprep.subr.bf16.mxu0 0
        %1492 = vmatpush2.bf16.msra.mxu0 0
        %1493 = vmatprep.subr.bf16.mxu0 0
        %1494 = vmatpush2.bf16.msra.mxu0 0
        %1495 = vmatprep.subr.bf16.mxu0 0
        %1496 = vmatpush2.bf16.msra.mxu0 0
        %1497 = vmatprep.mubr.bf16.mxu0 0
        %1498 = vmatmul.mubr.bf16.gmra.mxu0 %v1463
        %v1499 = vpop.f32.mrf.mxu0
        %v1500 = vadd.f32 0.0, %v1499
        %v1501 = vpop.f32.mrf.mxu0
        %v1502 = vpop.f32.mrf.mxu0
        %v1503 = vadd.f32 0.0, %v1502
        %v1504 = vpop.f32.mrf.mxu0
        %1505 = vdwg.mxu0
        %v1506 = vadd.f32 %v1436, %v1500
        %v1507 = vadd.f32 %v1437, %v1503
        %v1508 = vld [vmem:[#allocation2 + $0xc] sm:$0x3]
        %s1509 = scalar_lea.vmem %s7, 96
        %v1510 = vld [vmem:[%s1509] sm:$0xf]
        %v1511 = vld [vmem:[%s1509 + $0x4] sm:$0xf]
        %v1512 = vld [vmem:[%s1509 + $0x8] sm:$0xf]
        %v1513 = vld [vmem:[%s1509 + $0xc] sm:$0xf]
        %v1515 = vunpack.c.l.b16 %v1508
        %v1516 = vpack.c.b16 %v1515, %v1515
        %vm1517 = vsmask.f32 6400
        %v1519 = vshrl.u32 %v1446, 16
        %v1521 = vrot.slane %v1519, 1
        %v1522 = vshll.u32 %v1446, 16
        %v1524 = vrot.slane %v1522, 2
        %v1525 = vor.u32 %v1521, %v1524
        %v1527 = vshrl.u32 %v1516, 16
        %v1529 = vrot.slane %v1527, 1
        %v1530 = vshll.u32 %v1516, 16
        %v1532 = vrot.slane %v1530, 2
        %v1533 = vor.u32 %v1529, %v1532
        %v1534 = vsel %vm1517, %v1525, %v1533
        %v1539 = vunpack.c.l.b16 %v1510
        %v1540 = vunpack.c.l.b16 %v1511
        %v1541 = vunpack.c.l.b16 %v1512
        %v1542 = vunpack.c.l.b16 %v1513
        %v1543 = vpack.c.b16 %v1540, %v1539
        %v1544 = vpack.c.b16 %v1542, %v1541
        %v1548 = vsel %vm334, %v1534, 0
        %1550 = vmatprep.subr.bf16.mxu0 0
        %1551 = vmatpush1.bf16.msra.mxu0 0
        %1552 = vmatprep.subr.bf16.mxu0 0
        %1553 = vmatpush1.bf16.msra.mxu0 0
        %1554 = vmatprep.subr.bf16.mxu0 0
        %1555 = vmatpush1.bf16.msra.mxu0 0
        %1556 = vmatprep.subr.bf16.mxu0 0
        %1557 = vmatpush1.bf16.msra.mxu0 0
        %1558 = vmatprep.subr.bf16.mxu0 0
        %1559 = vmatpush1.bf16.msra.mxu0 0
        %1560 = vmatprep.subr.bf16.mxu0 0
        %1561 = vmatpush1.bf16.msra.mxu0 0
        %1562 = vmatprep.subr.bf16.mxu0 0
        %1563 = vmatpush1.bf16.msra.mxu0 %v1544
        %1564 = vmatprep.subr.bf16.mxu0 0
        %1565 = vmatpush1.bf16.msra.mxu0 %v1543
        %1566 = vmatprep.subr.bf16.mxu0 0
        %1567 = vmatpush2.bf16.msra.mxu0 0
        %1568 = vmatprep.subr.bf16.mxu0 0
        %1569 = vmatpush2.bf16.msra.mxu0 0
        %1570 = vmatprep.subr.bf16.mxu0 0
        %1571 = vmatpush2.bf16.msra.mxu0 0
        %1572 = vmatprep.subr.bf16.mxu0 0
        %1573 = vmatpush2.bf16.msra.mxu0 0
        %1574 = vmatprep.subr.bf16.mxu0 0
        %1575 = vmatpush2.bf16.msra.mxu0 0
        %1576 = vmatprep.subr.bf16.mxu0 0
        %1577 = vmatpush2.bf16.msra.mxu0 0
        %1578 = vmatprep.subr.bf16.mxu0 0
        %1579 = vmatpush2.bf16.msra.mxu0 0
        %1580 = vmatprep.subr.bf16.mxu0 0
        %1581 = vmatpush2.bf16.msra.mxu0 0
        %1582 = vmatprep.mubr.bf16.mxu0 0
        %1583 = vmatmul.mubr.bf16.gmra.mxu0 %v1548
        %v1584 = vpop.f32.mrf.mxu0
        %v1585 = vadd.f32 0.0, %v1584
        %v1586 = vpop.f32.mrf.mxu0
        %v1587 = vpop.f32.mrf.mxu0
        %v1588 = vadd.f32 0.0, %v1587
        %v1589 = vpop.f32.mrf.mxu0
        %1590 = vdwg.mxu0
        %v1591 = vadd.f32 %v1506, %v1585
        %v1592 = vadd.f32 %v1507, %v1588
        %v1593 = vld [vmem:[%s8] sm:$0x1]
        %v1595 = vlaneseq
        %v1596 = vshrl.u32 %v1595, 7
        %v1597 = vsub.s32 0, %v1596
        %v1598 = vrot.slane %v1593, %v1597
        %v1600 = vadd.f32 %v1591, %v1598
        %v1601 = vadd.f32 %v1592, %v1598
        %v1602 = vadd.f32 %v378, %v1600
        %v1603 = vadd.f32 %v379, %v1601
        %v1604 = vmul.f32 %v1602, 0.5
        %v1605 = vmul.f32 %v1603, 0.5
        %1606 = vst.msk [vmem:[%s325] sm:$0xff] %vm334, %v1604
        %1607 = vst.msk [vmem:[%s325 + $0x8] sm:$0xff] %vm334, %v1605
        %s1608 = sand.u32 %s225, 1
        %s1609 = scalar_lea.sflag [#allocation4], %s1608
        %s1610 = sand.u32 %s225, 1
        %s1611 = smul.addr %s1610, 16
        %s1612 = scalar_lea.vmem [#allocation3], %s1611
        // Predicated region
        $region57: #{protein_cnn_forward.1} parent=55 // pred_check
          %p1613 = pneg %p235
        $region58: #{protein_cnn_forward.1} parent=55 // pred_check_branch
          %1615 = sbr.rel (%p1613) target = $region60
        $region59: #{protein_cnn_forward.1} parent=55 // pred_region
          %s1617 = ssub.s32 256, 256
          %1618 = vsyncadd %s1609, %s1617
          %s1619 = smul.addr %s23, 2
          %s1620 = smul.addr %s1619, 128
          %s1621 = scalar_lea.hbm %s9, %s1620
          %s1622 = sshll.u32 %s1612, 4
          %s1623 = int_to_ptr.vmem [resolvable:$true] %s1622
          %1628 = dma.vmem_to_hbm [thread:$0]  %s1623, 256, %s1621, %s1609, 128, 128, 8
        $region60: #{protein_cnn_forward.1} parent=55 // pred_fallthru
          _
      $region56: #{protein_cnn_forward.1} parent=5 // pred_fallthru
        _
      %p1629 = scmp.le.s32.totalorder 2, %s18
      // Predicated region
      $region61: #{protein_cnn_forward.1} parent=5 // pred_check
        %p1630 = pneg %p1629
      $region62: #{protein_cnn_forward.1} parent=5 // pred_check_branch
        %1632 = sbr.rel (%p1630) target = $region64
      $region63: #{protein_cnn_forward.1} parent=5 // pred_region
        %s1633 = ssub.s32 %s18, 2
        // Predicated region
        $region65: #{protein_cnn_forward.1} parent=63 // pred_check
          %p1634 = pneg %p241
        $region66: #{protein_cnn_forward.1} parent=63 // pred_check_branch
          %1636 = sbr.rel (%p1634) target = $region68
        $region67: #{protein_cnn_forward.1} parent=63 // pred_region
          %s1637 = sand.u32 %s226, 1
          %s1638 = scalar_lea.sflag [#allocation4], %s1637
          %s1639 = sand.u32 %s226, 1
          %s1640 = smul.addr %s1639, 16
          %s1641 = scalar_lea.vmem [#allocation3], %s1640
          %1642 = dma.done %s1638, 256
        $region68: #{protein_cnn_forward.1} parent=63 // pred_fallthru
          _
      $region64: #{protein_cnn_forward.1} parent=5 // pred_fallthru
        _
    $region6: #{protein_cnn_forward.1} parent=1 // loop_footer
      %s22 = sadd.s32 1, %s18
    $region7: #{protein_cnn_forward.1} parent=1 // loop_footer_branch
      %17 = sbr.rel target = $region3
    $region8: #{protein_cnn_forward.1} parent=1 // loop_exit
      _
    %1643 = vsyncpa [#allocation4], 1
    %s1644 = scalar_lea.sflag [#allocation4], 1
    %1645 = vsyncpa %s1644, 1

</llo_original>
